<compile_context>
chip_gen: v7x
topology: tpu7x:2x2x1
jax: 0.10.0
libtpu: 0.0.40
codegen_flags: <defaults>
</compile_context>

<pallas_src>
import functools
import math

import numpy as np
import jax
import jax.numpy as jnp
from jax.experimental import pallas as pl
from jax.experimental.pallas import tpu as pltpu

NEG_SLOPE = 0.01                 # nn.LeakyReLU default
BN_EPS = 1e-5                    # nn.BatchNorm2d default
MATMUL_DTYPE = jnp.bfloat16      # MXU input dtype (accumulation stays f32)


# ---------------------------------------------------------------------------
# Kernel 1: per-batch im2col + (upsample o conv) matmul + partial BN stats
# ---------------------------------------------------------------------------
def conv_subpixel_kernel(xp_ref, w_ref, acc_ref, stats_ref):
    """One grid step = one batch element; everything stays in VMEM.

    xp_ref    : [H+2, W+2, Cin]  bf16  zero-padded input (pre-upsample grid)
    w_ref     : [9*Cin, P*Cout]  bf16  parity-packed sub-pixel conv weights
    acc_ref   : [H*W, P*Cout]    f32   conv output (pre-BN), parity-packed
    stats_ref : [2, P*Cout]      f32   row 0 = sum, row 1 = sum of squares
    """
    Hp, Wp, Cin = xp_ref.shape
    H, W = Hp - 2, Wp - 2
    K9 = 9 * Cin

    # In-kernel im2col on bf16 data: 9 shifted views folded into K.
    xp = xp_ref[...]
    taps = [xp[kh:kh + H, kw:kw + W, :] for kh in range(3) for kw in range(3)]
    patches = jnp.concatenate(taps, axis=-1).reshape(H * W, K9)   # [M, 9*Cin]

    # Single MXU matmul, bf16 in / f32 accumulate.  No conv bias: it is a
    # mathematical no-op under training-mode BatchNorm.
    acc = jnp.dot(patches, w_ref[...], preferred_element_type=jnp.float32)
    acc_ref[...] = acc

    # Per-batch partial BN statistics in f32 (combined across batch/parity
    # later, on tiny tensors, outside the kernel).
    stats_ref[0:1, :] = jnp.sum(acc, axis=0, keepdims=True)
    stats_ref[1:2, :] = jnp.sum(acc * acc, axis=0, keepdims=True)


# ---------------------------------------------------------------------------
# Kernel 2: cheap elementwise BN-apply + LeakyReLU (per batch, parallel)
# ---------------------------------------------------------------------------
def bn_lrelu_kernel(acc_ref, scale_ref, shift_ref, o_ref):
    """acc_ref [H*W, P*Cout] f32, scale/shift [1, P*Cout] f32 (resident)."""
    y = acc_ref[...] * scale_ref[...] + shift_ref[...]
    o_ref[...] = jnp.where(y >= 0.0, y, NEG_SLOPE * y)


# ---------------------------------------------------------------------------
# One-time weight packing (sub-pixel / parity decomposition of upsample+conv)
# ---------------------------------------------------------------------------
def _parity_matrices(stride):
    # R[d, o, k] = 1  iff  floor((d + k - 1) / stride) == o - 1
    # Output parity d of the upsampled grid sees original-grid offset (o - 1)
    # for conv tap k: nearest upsample + 3x3/pad1 conv collapses to stride^2
    # 3x3 convs on the original grid with tap-summed weights.
    R = np.zeros((stride, 3, 3), np.float32)
    for d in range(stride):
        for k in range(3):
            o = (d + k - 1) // stride + 1
            R[d, o, k] = 1.0
    return jnp.asarray(R)


def pack_params(params, stride):
    """Parity-combine, K-fold and bf16-cast the conv weights (done once)."""
    w = params["w"]                                     # HWIO [3,3,Cin,Cout]
    cin, cout = w.shape[2], w.shape[3]
    P = stride * stride
    R = _parity_matrices(stride)                        # [s, 3, 3]
    # W_eff[di,dj,oi,oj,c,n] = sum_{kh,kw} R[di,oi,kh] R[dj,oj,kw] W[kh,kw,c,n]
    weff = jnp.einsum("dak,ebl,klcn->deabcn", R, R, w)
    w_cat = jnp.transpose(weff, (2, 3, 4, 0, 1, 5)).reshape(9 * cin, P * cout)
    return {
        "w_cat": w_cat.astype(MATMUL_DTYPE),            # [9*Cin, P*Cout]
        "gamma": params["gamma"],                        # [Cout] f32
        "beta": params["beta"],                          # [Cout] f32
    }


# ---------------------------------------------------------------------------
# Wrapper: two gridded pallas_calls + tiny XLA per-channel math / layout
# ---------------------------------------------------------------------------
def conv_up_bn_relu_forward(packed, x_nchw, *, stride):
    B, Cin, H, W = x_nchw.shape
    Cout = packed["gamma"].shape[0]
    P = stride * stride
    Mt = H * W                       # rows per grid step (per batch element)
    N = P * Cout                     # parity-packed lane-dense output width
    K9 = 9 * Cin

    # NCHW -> NHWC, cast to bf16 BEFORE padding / the kernel (halves input DMA
    # and all in-kernel im2col relayout traffic).  Upsampled image and the 9x
    # im2col patches are never materialized in HBM.
    xp = jnp.pad(jnp.transpose(x_nchw, (0, 2, 3, 1)).astype(MATMUL_DTYPE),
                 ((0, 0), (1, 1), (1, 1), (0, 0)))

    # Pass 1: conv (sub-pixel folded) + per-batch partial BN statistics.
    acc, stats = pl.pallas_call(
        conv_subpixel_kernel,
        grid=(B,),
        out_shape=(jax.ShapeDtypeStruct((B, Mt, N), jnp.float32),
                   jax.ShapeDtypeStruct((B, 2, N), jnp.float32)),
        in_specs=[
            pl.BlockSpec((None, H + 2, W + 2, Cin), lambda b: (b, 0, 0, 0)),
            pl.BlockSpec((K9, N), lambda b: (0, 0)),      # weights: resident
        ],
        out_specs=(
            pl.BlockSpec((None, Mt, N), lambda b: (b, 0, 0)),
            pl.BlockSpec((None, 2, N), lambda b: (b, 0, 0)),
        ),
        compiler_params=pltpu.CompilerParams(
            dimension_semantics=("parallel",)),
    )(xp, packed["w_cat"])

    # BatchNorm2d training-mode statistics: combine per-batch / per-parity
    # partial sums on [Cout]-sized tensors (negligible XLA work).
    tot = jnp.sum(stats, axis=0)                          # [2, P*Cout]
    ssum = jnp.sum(tot[0].reshape(P, Cout), axis=0)       # [Cout]
    sqsum = jnp.sum(tot[1].reshape(P, Cout), axis=0)      # [Cout]
    n = float(B * Mt * P)            # = B * (stride*H) * (stride*W)
    mu = ssum / n
    var = jnp.maximum(sqsum / n - mu * mu, 0.0)           # biased, clamped
    scale = packed["gamma"] * jax.lax.rsqrt(var + BN_EPS)
    shift = packed["beta"] - mu * scale
    scale_p = jnp.tile(scale, P)[None, :]                 # [1, P*Cout]
    shift_p = jnp.tile(shift, P)[None, :]

    # Pass 2: elementwise BN-apply + LeakyReLU (parallel over batch).
    y = pl.pallas_call(
        bn_lrelu_kernel,
        grid=(B,),
        out_shape=jax.ShapeDtypeStruct((B, Mt, N), jnp.float32),
        in_specs=[
            pl.BlockSpec((None, Mt, N), lambda b: (b, 0, 0)),
            pl.BlockSpec((1, N), lambda b: (0, 0)),
            pl.BlockSpec((1, N), lambda b: (0, 0)),
        ],
        out_specs=pl.BlockSpec((None, Mt, N), lambda b: (b, 0, 0)),
        compiler_params=pltpu.CompilerParams(
            dimension_semantics=("parallel",)),
    )(acc, scale_p, shift_p)

    # De-interleave the stride^2 parity blocks back to NCHW (layout plumbing).
    out = y.reshape(B, H, W, stride, stride, Cout)
    out = out.transpose(0, 1, 3, 2, 4, 5).reshape(B, stride * H, stride * W, Cout)
    return jnp.transpose(out, (0, 3, 1, 2))               # NCHW [B,Cout,sH,sW]


# ---------------------------------------------------------------------------
# Params (PyTorch-style defaults) and a pure-XLA reference for validation
# ---------------------------------------------------------------------------
def init_params(key, cin, cout):
    k1, k2 = jax.random.split(key)
    bound = 1.0 / math.sqrt(cin * 9.0)                    # Conv2d default bound
    # HWIO layout [3, 3, Cin, Cout]  (== torch weight.permute(2, 3, 1, 0))
    w = jax.random.uniform(k1, (3, 3, cin, cout), jnp.float32, -bound, bound)
    b = jax.random.uniform(k2, (cout,), jnp.float32, -bound, bound)
    gamma = jnp.ones((cout,), jnp.float32)                # BatchNorm2d weight
    beta = jnp.zeros((cout,), jnp.float32)                # BatchNorm2d bias
    return {"w": w, "b": b, "gamma": gamma, "beta": beta}


def reference_forward(params, x_nchw, stride):
    # Pure-XLA reference mirroring the PyTorch module (training-mode BN).
    # Note: the conv BIAS is applied here; the Pallas kernel drops it because
    # it cancels exactly under batch-statistics BatchNorm.
    x = jnp.repeat(jnp.repeat(x_nchw, stride, axis=2), stride, axis=3)
    w_oihw = jnp.transpose(params["w"], (3, 2, 0, 1))
    y = jax.lax.conv_general_dilated(
        x, w_oihw, window_strides=(1, 1), padding=((1, 1), (1, 1)),
        dimension_numbers=("NCHW", "OIHW", "NCHW"))
    y = y + params["b"][None, :, None, None]
    mu = jnp.mean(y, axis=(0, 2, 3), keepdims=True)
    var = jnp.mean((y - mu) ** 2, axis=(0, 2, 3), keepdims=True)
    y = (y - mu) * jax.lax.rsqrt(var + BN_EPS)
    y = y * params["gamma"][None, :, None, None] + params["beta"][None, :, None, None]
    return jnp.where(y >= 0.0, y, NEG_SLOPE * y)


if __name__ == "__main__":
    key = jax.random.PRNGKey(0)
    kp, kx = jax.random.split(key)

    B, CIN, COUT, H, W, STRIDE = 2, 16, 32, 16, 16, 2
    params = init_params(kp, CIN, COUT)
    x = jax.random.normal(kx, (B, CIN, H, W), jnp.float32)

    packed = pack_params(params, STRIDE)                  # one-time weight prep
    fwd = jax.jit(functools.partial(conv_up_bn_relu_forward, stride=STRIDE))
    out = jax.block_until_ready(fwd(packed, x))

    assert out.shape == (B, COUT, STRIDE * H, STRIDE * W), out.shape
    assert bool(jnp.all(jnp.isfinite(out)))

    # Validate against the pure-XLA reference (loose tol for bf16 MXU inputs).
    ref = jax.block_until_ready(reference_forward(params, x, STRIDE))
    np.testing.assert_allclose(np.asarray(out), np.asarray(ref),
                               atol=5e-2, rtol=5e-2)
    print("KERNEL_OK")
</pallas_src>

<mosaic_0001>
module attributes {stable_mosaic.version = 11 : i64} {
  func.func @conv_subpixel_kernel(%arg0: i32, %arg1: memref<1x18x18x16xbf16, #tpu.memory_space<vmem>>, %arg2: memref<144x128xbf16, #tpu.memory_space<vmem>>, %arg3: memref<1x256x128xf32, #tpu.memory_space<vmem>>, %arg4: memref<1x2x128xf32, #tpu.memory_space<vmem>>) attributes {dimension_semantics = [#tpu.dimension_semantics<parallel>], iteration_bounds = array<i64: 2>, scalar_prefetch = 0 : i64, scratch_operands = 0 : i64, tpu.core_type = #tpu.core_type<tc>, window_params = [{transform_indices = @transform_0, window_bounds = array<i64: 1, 18, 18, 16>}, {pipeline_mode = #tpu.pipeline_mode<synchronous>, transform_indices = @transform_1, window_bounds = array<i64: 144, 128>}, {transform_indices = @transform_2, window_bounds = array<i64: 1, 256, 128>}, {transform_indices = @transform_3, window_bounds = array<i64: 1, 2, 128>}]} {
    %c0 = arith.constant 0 : index
    %c0_0 = arith.constant 0 : index
    %c0_1 = arith.constant 0 : index
    %c0_2 = arith.constant 0 : index
    %0 = vector.load %arg1[%c0, %c0_0, %c0_1, %c0_2] : memref<1x18x18x16xbf16, #tpu.memory_space<vmem>>, vector<1x18x18x16xbf16>
    %1 = vector.shape_cast %0 : vector<1x18x18x16xbf16> to vector<18x18x16xbf16>
    %2 = vector.extract_strided_slice %1 {offsets = [0, 0, 0], sizes = [16, 16, 16], strides = [1, 1, 1]} : vector<18x18x16xbf16> to vector<16x16x16xbf16>
    %3 = vector.extract_strided_slice %1 {offsets = [0, 1, 0], sizes = [16, 16, 16], strides = [1, 1, 1]} : vector<18x18x16xbf16> to vector<16x16x16xbf16>
    %4 = vector.extract_strided_slice %1 {offsets = [0, 2, 0], sizes = [16, 16, 16], strides = [1, 1, 1]} : vector<18x18x16xbf16> to vector<16x16x16xbf16>
    %5 = vector.extract_strided_slice %1 {offsets = [1, 0, 0], sizes = [16, 16, 16], strides = [1, 1, 1]} : vector<18x18x16xbf16> to vector<16x16x16xbf16>
    %6 = vector.extract_strided_slice %1 {offsets = [1, 1, 0], sizes = [16, 16, 16], strides = [1, 1, 1]} : vector<18x18x16xbf16> to vector<16x16x16xbf16>
    %7 = vector.extract_strided_slice %1 {offsets = [1, 2, 0], sizes = [16, 16, 16], strides = [1, 1, 1]} : vector<18x18x16xbf16> to vector<16x16x16xbf16>
    %8 = vector.extract_strided_slice %1 {offsets = [2, 0, 0], sizes = [16, 16, 16], strides = [1, 1, 1]} : vector<18x18x16xbf16> to vector<16x16x16xbf16>
    %9 = vector.extract_strided_slice %1 {offsets = [2, 1, 0], sizes = [16, 16, 16], strides = [1, 1, 1]} : vector<18x18x16xbf16> to vector<16x16x16xbf16>
    %10 = vector.extract_strided_slice %1 {offsets = [2, 2, 0], sizes = [16, 16, 16], strides = [1, 1, 1]} : vector<18x18x16xbf16> to vector<16x16x16xbf16>
    %11 = tpu.concatenate %2, %3, %4, %5, %6, %7, %8, %9, %10 in 2 : vector<16x16x16xbf16>, vector<16x16x16xbf16>, vector<16x16x16xbf16>, vector<16x16x16xbf16>, vector<16x16x16xbf16>, vector<16x16x16xbf16>, vector<16x16x16xbf16>, vector<16x16x16xbf16>, vector<16x16x16xbf16> -> vector<16x16x144xbf16>
    %12 = vector.shape_cast %11 : vector<16x16x144xbf16> to vector<256x144xbf16>
    %c0_3 = arith.constant 0 : index
    %c0_4 = arith.constant 0 : index
    %13 = vector.load %arg2[%c0_3, %c0_4] : memref<144x128xbf16, #tpu.memory_space<vmem>>, vector<144x128xbf16>
    %cst = arith.constant dense<0.000000e+00> : vector<256x128xf32>
    %14 = tpu.matmul %12, %13, %cst {dimension_numbers = #tpu.dot_dimension_numbers<[1], [0], [0], [1], [0, 0, 1, 1], [], []>} : vector<256x144xbf16>, vector<144x128xbf16>, vector<256x128xf32> -> vector<256x128xf32>
    %c0_5 = arith.constant 0 : index
    %c0_6 = arith.constant 0 : index
    %c0_7 = arith.constant 0 : index
    %15 = vector.load %arg3[%c0_5, %c0_6, %c0_7] : memref<1x256x128xf32, #tpu.memory_space<vmem>>, vector<1x256x128xf32>
    %16 = vector.shape_cast %15 : vector<1x256x128xf32> to vector<256x128xf32>
    %17 = vector.shape_cast %14 : vector<256x128xf32> to vector<1x256x128xf32>
    tpu.vector_store %arg3[%c0_5, %c0_6, %c0_7], %17 {strides = array<i32>} : memref<1x256x128xf32, #tpu.memory_space<vmem>>, vector<1x256x128xf32>,
    %cst_8 = arith.constant dense<0.000000e+00> : vector<128xf32>
    %18 = vector.multi_reduction <add>, %14, %cst_8 [0] : vector<256x128xf32> to vector<128xf32>
    %19 = vector.shape_cast %18 : vector<128xf32> to vector<1x128xf32>
    %c0_9 = arith.constant 0 : index
    %c0_10 = arith.constant 0 : index
    %c0_11 = arith.constant 0 : index
    %20 = vector.load %arg4[%c0_9, %c0_10, %c0_11] : memref<1x2x128xf32, #tpu.memory_space<vmem>>, vector<1x1x128xf32>
    %21 = vector.shape_cast %20 : vector<1x1x128xf32> to vector<1x128xf32>
    %22 = vector.shape_cast %19 : vector<1x128xf32> to vector<1x1x128xf32>
    tpu.vector_store %arg4[%c0_9, %c0_10, %c0_11], %22 {strides = array<i32>} : memref<1x2x128xf32, #tpu.memory_space<vmem>>, vector<1x1x128xf32>,
    %23 = arith.mulf %14, %14 : vector<256x128xf32>
    %cst_12 = arith.constant dense<0.000000e+00> : vector<128xf32>
    %24 = vector.multi_reduction <add>, %23, %cst_12 [0] : vector<256x128xf32> to vector<128xf32>
    %25 = vector.shape_cast %24 : vector<128xf32> to vector<1x128xf32>
    %c0_13 = arith.constant 0 : index
    %c1 = arith.constant 1 : index
    %c0_14 = arith.constant 0 : index
    %26 = vector.load %arg4[%c0_13, %c1, %c0_14] : memref<1x2x128xf32, #tpu.memory_space<vmem>>, vector<1x1x128xf32>
    %27 = vector.shape_cast %26 : vector<1x1x128xf32> to vector<1x128xf32>
    %28 = vector.shape_cast %25 : vector<1x128xf32> to vector<1x1x128xf32>
    tpu.vector_store %arg4[%c0_13, %c1, %c0_14], %28 {strides = array<i32>} : memref<1x2x128xf32, #tpu.memory_space<vmem>>, vector<1x1x128xf32>,
    return
  }
  func.func @transform_0(%arg0: i32) -> (i32, i32, i32, i32) {
    %c0_i32 = arith.constant 0 : i32
    %c0_i32_0 = arith.constant 0 : i32
    %c0_i32_1 = arith.constant 0 : i32
    %c0_i32_2 = arith.constant 0 : i32
    return %arg0, %c0_i32, %c0_i32_0, %c0_i32_1 : i32, i32, i32, i32
  }
  func.func @transform_1(%arg0: i32) -> (i32, i32) {
    %c0_i32 = arith.constant 0 : i32
    %c0_i32_0 = arith.constant 0 : i32
    %c0_i32_1 = arith.constant 0 : i32
    return %c0_i32, %c0_i32_0 : i32, i32
  }
  func.func @transform_2(%arg0: i32) -> (i32, i32, i32) {
    %c0_i32 = arith.constant 0 : i32
    %c0_i32_0 = arith.constant 0 : i32
    %c0_i32_1 = arith.constant 0 : i32
    return %arg0, %c0_i32, %c0_i32_0 : i32, i32, i32
  }
  func.func @transform_3(%arg0: i32) -> (i32, i32, i32) {
    %c0_i32 = arith.constant 0 : i32
    %c0_i32_0 = arith.constant 0 : i32
    %c0_i32_1 = arith.constant 0 : i32
    return %arg0, %c0_i32, %c0_i32_0 : i32, i32, i32
  }
}

module attributes {stable_mosaic.version = 11 : i64} {
  func.func @bn_lrelu_kernel(%arg0: i32, %arg1: memref<1x256x128xf32, #tpu.memory_space<vmem>>, %arg2: memref<1x128xf32, #tpu.memory_space<vmem>>, %arg3: memref<1x128xf32, #tpu.memory_space<vmem>>, %arg4: memref<1x256x128xf32, #tpu.memory_space<vmem>>) attributes {dimension_semantics = [#tpu.dimension_semantics<parallel>], iteration_bounds = array<i64: 2>, scalar_prefetch = 0 : i64, scratch_operands = 0 : i64, tpu.core_type = #tpu.core_type<tc>, window_params = [{transform_indices = @transform_0, window_bounds = array<i64: 1, 256, 128>}, {pipeline_mode = #tpu.pipeline_mode<synchronous>, transform_indices = @transform_1, window_bounds = array<i64: 1, 128>}, {pipeline_mode = #tpu.pipeline_mode<synchronous>, transform_indices = @transform_2, window_bounds = array<i64: 1, 128>}, {transform_indices = @transform_3, window_bounds = array<i64: 1, 256, 128>}]} {
    %c0 = arith.constant 0 : index
    %c0_0 = arith.constant 0 : index
    %c0_1 = arith.constant 0 : index
    %0 = vector.load %arg1[%c0, %c0_0, %c0_1] : memref<1x256x128xf32, #tpu.memory_space<vmem>>, vector<1x256x128xf32>
    %1 = vector.shape_cast %0 : vector<1x256x128xf32> to vector<256x128xf32>
    %c0_2 = arith.constant 0 : index
    %c0_3 = arith.constant 0 : index
    %2 = vector.load %arg2[%c0_2, %c0_3] : memref<1x128xf32, #tpu.memory_space<vmem>>, vector<1x128xf32>
    %3 = vector.broadcast %2 : vector<1x128xf32> to vector<256x128xf32>
    %4 = arith.mulf %1, %3 : vector<256x128xf32>
    %c0_4 = arith.constant 0 : index
    %c0_5 = arith.constant 0 : index
    %5 = vector.load %arg3[%c0_4, %c0_5] : memref<1x128xf32, #tpu.memory_space<vmem>>, vector<1x128xf32>
    %6 = vector.broadcast %5 : vector<1x128xf32> to vector<256x128xf32>
    %7 = arith.addf %4, %6 : vector<256x128xf32>
    %cst = arith.constant 0.000000e+00 : f32
    %8 = vector.broadcast %cst : f32 to vector<256x128xf32>
    %9 = arith.cmpf oge, %7, %8 : vector<256x128xf32>
    %cst_6 = arith.constant 0.00999999977 : f32
    %10 = vector.broadcast %cst_6 : f32 to vector<256x128xf32>
    %11 = arith.mulf %10, %7 : vector<256x128xf32>
    %12 = arith.select %9, %7, %11 : vector<256x128xi1>, vector<256x128xf32>
    %c0_7 = arith.constant 0 : index
    %c0_8 = arith.constant 0 : index
    %c0_9 = arith.constant 0 : index
    %13 = vector.load %arg4[%c0_7, %c0_8, %c0_9] : memref<1x256x128xf32, #tpu.memory_space<vmem>>, vector<1x256x128xf32>
    %14 = vector.shape_cast %13 : vector<1x256x128xf32> to vector<256x128xf32>
    %15 = vector.shape_cast %12 : vector<256x128xf32> to vector<1x256x128xf32>
    tpu.vector_store %arg4[%c0_7, %c0_8, %c0_9], %15 {strides = array<i32>} : memref<1x256x128xf32, #tpu.memory_space<vmem>>, vector<1x256x128xf32>,
    return
  }
  func.func @transform_0(%arg0: i32) -> (i32, i32, i32) {
    %c0_i32 = arith.constant 0 : i32
    %c0_i32_0 = arith.constant 0 : i32
    %c0_i32_1 = arith.constant 0 : i32
    return %arg0, %c0_i32, %c0_i32_0 : i32, i32, i32
  }
  func.func @transform_1(%arg0: i32) -> (i32, i32) {
    %c0_i32 = arith.constant 0 : i32
    %c0_i32_0 = arith.constant 0 : i32
    %c0_i32_1 = arith.constant 0 : i32
    return %c0_i32, %c0_i32_0 : i32, i32
  }
  func.func @transform_2(%arg0: i32) -> (i32, i32) {
    %c0_i32 = arith.constant 0 : i32
    %c0_i32_0 = arith.constant 0 : i32
    %c0_i32_1 = arith.constant 0 : i32
    return %c0_i32, %c0_i32_0 : i32, i32
  }
  func.func @transform_3(%arg0: i32) -> (i32, i32, i32) {
    %c0_i32 = arith.constant 0 : i32
    %c0_i32_0 = arith.constant 0 : i32
    %c0_i32_1 = arith.constant 0 : i32
    return %arg0, %c0_i32, %c0_i32_0 : i32, i32, i32
  }
}

</mosaic_0001>

<llo_original>
// kernel: squeeze.2
$region0: #{squeeze.2}
  %s0 = inlined_call_operand.vmem [shape: f32[128], index: 0, kind: input, shape index: {}]
  %s1 = inlined_call_operand.vmem [shape: f32[4,32], index: 1, kind: output, shape index: {}]
  $region1: #{squeeze.2} parent=0
    #allocation0 [shape = 'u8[4096]{0}', space=vmem, size = 0x1000, scoped, tag = 'scoped mem for output reshape']
    #allocation1 [shape = 'u8[4096]{0}', space=vmem, size = 0x1000, scoped, tag = 'scoped mem for input reshape']
    %s3 = sshllo.u32 0, 1
    %v4 = vld [vmem:[%s0] sm:%s3]
    %5 = vst [vmem:[#allocation1] sm:%s3] %v4
    %v6 = vld [vmem:[#allocation1] sm:$0x1]
    %vm7 = vcmask 261120
    %8 = vst.msk [vmem:[#allocation0] sm:$0x1] %vm7, %v6
    %v9 = vld [vmem:[#allocation1] sm:$0x1]
    %10 = vrot.lane.b32.xlu0 %v9, 96
    %v11 = vpop.permute.xlu0 %10
    %vm12 = vcmask 261120
    %s13 = scalar_lea.vmem [#allocation0], 1
    %14 = vst.msk [vmem:[%s13] sm:$0x1] %vm12, %v11
    %v15 = vld [vmem:[#allocation1] sm:$0x1]
    %16 = vrot.lane.b32.xlu0 %v15, 64
    %v17 = vpop.permute.xlu0 %16
    %vm18 = vcmask 261120
    %s19 = scalar_lea.vmem [#allocation0], 2
    %20 = vst.msk [vmem:[%s19] sm:$0x1] %vm18, %v17
    %v21 = vld [vmem:[#allocation1] sm:$0x1]
    %22 = vrot.lane.b32.xlu0 %v21, 32
    %v23 = vpop.permute.xlu0 %22
    %vm24 = vcmask 261120
    %s25 = scalar_lea.vmem [#allocation0], 3
    %26 = vst.msk [vmem:[%s25] sm:$0x1] %vm24, %v23
    %s28 = sshllo.u32 0, 4
    %v30 = vld [vmem:[#allocation0] sm:%s28]
    %s31 = sshllo.u32 0, 4
    %32 = vst [vmem:[%s1] sm:%s31] %v30

// kernel: tile.18
$region0: #{tile.18}
  #allocation0 [shape = 's32[1]{0}', space=sflag, size = 0x4, scoped, tag = 'scoped memory for tile.18']
  %s0 = inlined_call_operand.vmem [shape: f32[32], index: 0, kind: input, shape index: {}]
  %s1 = inlined_call_operand.vmem [shape: f32[4,32], index: 1, kind: output, shape index: {}]
  // Predicated region
  $region2: #{tile.18} parent=0 // pred_check
    _
  $region3: #{tile.18} parent=0 // pred_check_branch
    %3 = sbr.rel (0) target = $region5
  $region4: #{tile.18} parent=0 // pred_region
    _
  $region5: #{tile.18} parent=0 // pred_fallthru
    _
  %v4 = vld [vmem:[%s0] ss:$0 sm:$0xff]
  %5 = vst [vmem:[%s1] sm:$0xf] %v4

// kernel: tile.19
$region0: #{tile.19}
  %s0 = inlined_call_operand.vmem [shape: f32[4,32], index: 0, kind: input, shape index: {}]
  %s1 = inlined_call_operand.vmem [shape: f32[1,128], index: 1, kind: output, shape index: {}]
  $region1: #{tile.19} parent=0
    #allocation0 [shape = 'u8[4096]{0}', space=vmem, size = 0x1000, scoped, tag = 'scoped mem for output reshape']
    #allocation1 [shape = 'u8[4096]{0}', space=vmem, size = 0x1000, scoped, tag = 'scoped mem for input reshape']
    %s3 = sshllo.u32 0, 4
    %v4 = vld [vmem:[%s0] sm:%s3]
    %5 = vst [vmem:[#allocation1] sm:%s3] %v4
    %v6 = vld [vmem:[#allocation1] sm:$0x1]
    %vm7 = vcmask 261120
    %8 = vst.msk [vmem:[#allocation0] sm:$0x1] %vm7, %v6
    %s9 = scalar_lea.vmem [#allocation1], 3
    %v10 = vld [vmem:[%s9] sm:$0x1]
    %11 = vrot.lane.b32.xlu0 %v10, 96
    %v12 = vpop.permute.xlu0 %11
    %vm13 = vcmask 1048320
    %14 = vst.msk [vmem:[#allocation0] sm:$0x1] %vm13, %v12
    %s15 = scalar_lea.vmem [#allocation1], 2
    %v16 = vld [vmem:[%s15] sm:$0x1]
    %17 = vrot.lane.b32.xlu0 %v16, 64
    %v18 = vpop.permute.xlu0 %17
    %vm19 = vcmask 785920
    %20 = vst.msk [vmem:[#allocation0] sm:$0x1] %vm19, %v18
    %s21 = scalar_lea.vmem [#allocation1], 1
    %v22 = vld [vmem:[%s21] sm:$0x1]
    %23 = vrot.lane.b32.xlu0 %v22, 32
    %v24 = vpop.permute.xlu0 %23
    %vm25 = vcmask 523520
    %26 = vst.msk [vmem:[#allocation0] sm:$0x1] %vm25, %v24
    %s28 = sshllo.u32 0, 1
    %v30 = vld [vmem:[#allocation0] sm:%s28]
    %s31 = sshllo.u32 0, 1
    %32 = vst [vmem:[%s1] sm:%s31] %v30

// kernel: conv_up_bn_relu_forward.3
$region0: #{conv_up_bn_relu_forward.3}
  #allocation0 [shape = 'u32[]', space=smem, size = 0x4, offset = 0x4, fixed_abs, tag = 'smem constant byte address 0x4 - core index']
  #allocation1 [shape = 'u32[144,128]{1,0:T(1,128)}', space=vmem, size = 0x12000, scoped, tag = 'internal scratch']
  %s0 = inlined_call_operand.vmem [shape: f32[2,256,128], index: 0, kind: input, shape index: {}]
  %s1 = inlined_call_operand.vmem [shape: f32[1,128], index: 1, kind: input, shape index: {}]
  %s2 = inlined_call_operand.vmem [shape: f32[1,128], index: 2, kind: input, shape index: {}]
  %s3 = inlined_call_operand.vmem [shape: f32[2,256,128], index: 3, kind: output, shape index: {}]
  %s4 = sld [smem:[#allocation0]]
  $region45: #{conv_up_bn_relu_forward.3} parent=0
    _
  %s6 = ssub.s32 1, %s4
  %s7 = scalar_select 0, %s6, %s4
  loop: start=0, step=1, limit=4
  $region2: #{conv_up_bn_relu_forward.3} parent=0 // loop_pre_header
    _
  $region3: #{conv_up_bn_relu_forward.3} parent=0 // loop_header
    %s9 = sphi 0, %s13
    %p10 = scmp.ge.s32.totalorder %s9, 4
    %s19 = sphi 0, %s21
    %s22 = sphi 0, %s19
    %s23 = sphi 0, %s22
    %s39 = sphi 0, %s23
    %s43 = sphi 0, %s43
    %s45 = sphi 0, %s43
    %s46 = sphi 0, %s45
    %s60 = sphi 0, %s46
    %s64 = sphi 0, %s64
    %s66 = sphi 0, %s64
    %s67 = sphi 0, %s66
    %s81 = sphi 0, %s67
    %s87 = sphi 0, %s89
    %s90 = sphi 0, %s87
    %s91 = sphi 0, %s90
    %s107 = sphi 0, %s91
  $region4: #{conv_up_bn_relu_forward.3} parent=0 // loop_header_branch
    %12 = sbr.rel (%p10) target = $region8
  $region5: #{conv_up_bn_relu_forward.3} parent=0 // loop_body
    %s14 = ssub.s32 %s9, 1
    %s15 = ssub.s32 %s9, 2
    %s16 = sadd.s32 %s9, 1
    %s17 = ssub.s32 %s9, %s16
    %p18 = scmp.eq.s32.totalorder %s17, 0
    %s20 = sadd.s32 %s19, 1
    %s21 = scalar_select %p18, %s19, %s20
    %p24 = pneg %p18
    %p25 = scmp.eq.s32.totalorder %s9, 1
    %p26 = por %p24, %p25
    %p27 = scmp.ne.s32.totalorder %s19, %s22
    %p28 = scmp.eq.s32.totalorder %s9, 0
    %p29 = por %p27, %p28
    %p30 = scmp.ne.s32.totalorder %s19, %s22
    %p31 = scmp.eq.s32.totalorder %s14, 1
    %p32 = por %p30, %p31
    %p33 = scmp.ne.s32.totalorder %s22, %s23
    %p34 = scmp.eq.s32.totalorder %s14, 0
    %p35 = por %p33, %p34
    %p36 = scmp.ne.s32.totalorder %s22, %s23
    %p37 = scmp.eq.s32.totalorder %s15, 1
    %p38 = por %p36, %p37
    %p40 = scmp.ne.s32.totalorder %s23, %s39
    %p41 = scmp.eq.s32.totalorder %s15, 0
    %p42 = por %p40, %p41
    %s44 = sadd.s32 %s43, 1
    %p47 = scmp.eq.s32.totalorder %s9, 1
    %p48 = scmp.ne.s32.totalorder %s43, %s45
    %p49 = scmp.eq.s32.totalorder %s9, 0
    %p50 = por %p48, %p49
    %p51 = scmp.ne.s32.totalorder %s43, %s45
    %p52 = scmp.eq.s32.totalorder %s14, 1
    %p53 = por %p51, %p52
    %p54 = scmp.ne.s32.totalorder %s45, %s46
    %p55 = scmp.eq.s32.totalorder %s14, 0
    %p56 = por %p54, %p55
    %p57 = scmp.ne.s32.totalorder %s45, %s46
    %p58 = scmp.eq.s32.totalorder %s15, 1
    %p59 = por %p57, %p58
    %p61 = scmp.ne.s32.totalorder %s46, %s60
    %p62 = scmp.eq.s32.totalorder %s15, 0
    %p63 = por %p61, %p62
    %s65 = sadd.s32 %s64, 1
    %p68 = scmp.eq.s32.totalorder %s9, 1
    %p69 = scmp.ne.s32.totalorder %s64, %s66
    %p70 = scmp.eq.s32.totalorder %s9, 0
    %p71 = por %p69, %p70
    %p72 = scmp.ne.s32.totalorder %s64, %s66
    %p73 = scmp.eq.s32.totalorder %s14, 1
    %p74 = por %p72, %p73
    %p75 = scmp.ne.s32.totalorder %s66, %s67
    %p76 = scmp.eq.s32.totalorder %s14, 0
    %p77 = por %p75, %p76
    %p78 = scmp.ne.s32.totalorder %s66, %s67
    %p79 = scmp.eq.s32.totalorder %s15, 1
    %p80 = por %p78, %p79
    %p82 = scmp.ne.s32.totalorder %s67, %s81
    %p83 = scmp.eq.s32.totalorder %s15, 0
    %p84 = por %p82, %p83
    %s85 = ssub.s32 %s9, %s16
    %p86 = scmp.eq.s32.totalorder %s85, 0
    %s88 = sadd.s32 %s87, 1
    %s89 = scalar_select %p86, %s87, %s88
    %p92 = pneg %p86
    %p93 = scmp.eq.s32.totalorder %s9, 1
    %p94 = por %p92, %p93
    %p95 = scmp.ne.s32.totalorder %s87, %s90
    %p96 = scmp.eq.s32.totalorder %s9, 0
    %p97 = por %p95, %p96
    %p98 = scmp.ne.s32.totalorder %s87, %s90
    %p99 = scmp.eq.s32.totalorder %s14, 1
    %p100 = por %p98, %p99
    %p101 = scmp.ne.s32.totalorder %s90, %s91
    %p102 = scmp.eq.s32.totalorder %s14, 0
    %p103 = por %p101, %p102
    %p104 = scmp.ne.s32.totalorder %s90, %s91
    %p105 = scmp.eq.s32.totalorder %s15, 1
    %p106 = por %p104, %p105
    %p108 = scmp.ne.s32.totalorder %s91, %s107
    %p109 = scmp.eq.s32.totalorder %s15, 0
    %p110 = por %p108, %p109
    %p111 = scmp.le.s32.totalorder 1, %s9
    %p112 = scmp.lt.s32.totalorder %s9, 3
    %p113 = pnand %p111, %p112
    %p114 = pneg %p113
    // Predicated region
    $region9: #{conv_up_bn_relu_forward.3} parent=5 // pred_check
      _
    $region10: #{conv_up_bn_relu_forward.3} parent=5 // pred_check_branch
      %116 = sbr.rel (%p113) target = $region12
    $region11: #{conv_up_bn_relu_forward.3} parent=5 // pred_region
      %s117 = ssub.s32 %s9, 1
      // Predicated region
      $region13: #{conv_up_bn_relu_forward.3} parent=11 // pred_check
        %p118 = pneg %p56
      $region14: #{conv_up_bn_relu_forward.3} parent=11 // pred_check_branch
        %120 = sbr.rel (%p118) target = $region16
      $region15: #{conv_up_bn_relu_forward.3} parent=11 // pred_region
        _
      $region16: #{conv_up_bn_relu_forward.3} parent=11 // pred_fallthru
        _
      // Predicated region
      $region17: #{conv_up_bn_relu_forward.3} parent=11 // pred_check
        %p121 = pneg %p77
      $region18: #{conv_up_bn_relu_forward.3} parent=11 // pred_check_branch
        %123 = sbr.rel (%p121) target = $region20
      $region19: #{conv_up_bn_relu_forward.3} parent=11 // pred_region
        _
      $region20: #{conv_up_bn_relu_forward.3} parent=11 // pred_fallthru
        _
    $region12: #{conv_up_bn_relu_forward.3} parent=5 // pred_fallthru
      _
    %p124 = scmp.lt.s32.totalorder %s9, 2
    // Predicated region
    $region21: #{conv_up_bn_relu_forward.3} parent=5 // pred_check
      %p125 = pneg %p124
    $region22: #{conv_up_bn_relu_forward.3} parent=5 // pred_check_branch
      %127 = sbr.rel (%p125) target = $region24
    $region23: #{conv_up_bn_relu_forward.3} parent=5 // pred_region
      // Predicated region
      $region25: #{conv_up_bn_relu_forward.3} parent=23 // pred_check
        %p128 = pneg %p29
      $region26: #{conv_up_bn_relu_forward.3} parent=23 // pred_check_branch
        %130 = sbr.rel (%p128) target = $region28
      $region27: #{conv_up_bn_relu_forward.3} parent=23 // pred_region
        %p131 = scmp.lt.s32.totalorder %s9, 1
        %s132 = scalar_select %p131, %s9, 1
        %s133 = smul.addr %s132, 32
        %s134 = smul.addr %s133, 8
        %s135 = scalar_lea.vmem %s0, %s134
      $region28: #{conv_up_bn_relu_forward.3} parent=23 // pred_fallthru
        _
    $region24: #{conv_up_bn_relu_forward.3} parent=5 // pred_fallthru
      _
    %p136 = scmp.le.s32.totalorder 1, %s9
    %p137 = scmp.lt.s32.totalorder %s9, 3
    %p138 = pnand %p136, %p137
    %p139 = pneg %p138
    // Predicated region
    $region29: #{conv_up_bn_relu_forward.3} parent=5 // pred_check
      _
    $region30: #{conv_up_bn_relu_forward.3} parent=5 // pred_check_branch
      %141 = sbr.rel (%p138) target = $region32
    $region31: #{conv_up_bn_relu_forward.3} parent=5 // pred_region
      %s142 = ssub.s32 %s9, 1
      %p143 = scmp.lt.s32.totalorder %s14, 1
      %s144 = scalar_select %p143, %s14, 1
      %s145 = smul.addr %s144, 32
      %s146 = smul.addr %s145, 8
      %s147 = scalar_lea.vmem %s0, %s146
      %p148 = pneg %p35
      %p149 = pneg %p32
      %p150 = pneg %p56
      %p151 = pneg %p53
      %p152 = pneg %p77
      %p153 = pneg %p74
      %p154 = pneg %p103
      %p155 = pneg %p100
      %p156 = scmp.lt.s32.totalorder %s14, 1
      %s157 = scalar_select %p156, %s14, 1
      %s158 = smul.addr %s157, 32
      %s159 = smul.addr %s158, 8
      %s160 = scalar_lea.vmem %s3, %s159
      %p161 = scmp.lt.s32.totalorder %s14, 1
      %s162 = scalar_select %p161, %s14, 1
      %s163 = smul.addr %s162, 32
      %s164 = smul.addr %s163, 8
      %s165 = scalar_lea.vmem %s0, %s164
      %p166 = scmp.lt.s32.totalorder %s14, 1
      %s167 = scalar_select %p166, %s14, 1
      %s168 = smul.addr %s167, 32
      %s169 = smul.addr %s168, 8
      %s170 = scalar_lea.vmem %s3, %s169
      %v171 = vld [vmem:[%s165] sm:$0xff]
      %v172 = vld [vmem:[%s165 + $0x8] sm:$0xff]
      %v173 = vld [vmem:[%s165 + $0x10] sm:$0xff]
      %v174 = vld [vmem:[%s165 + $0x18] sm:$0xff]
      %v175 = vld [vmem:[%s165 + $0x20] sm:$0xff]
      %v176 = vld [vmem:[%s165 + $0x28] sm:$0xff]
      %v177 = vld [vmem:[%s165 + $0x30] sm:$0xff]
      %v178 = vld [vmem:[%s165 + $0x38] sm:$0xff]
      %v179 = vld [vmem:[%s165 + $0x40] sm:$0xff]
      %v180 = vld [vmem:[%s165 + $0x48] sm:$0xff]
      %v181 = vld [vmem:[%s165 + $0x50] sm:$0xff]
      %v182 = vld [vmem:[%s165 + $0x58] sm:$0xff]
      %v183 = vld [vmem:[%s165 + $0x60] sm:$0xff]
      %v184 = vld [vmem:[%s165 + $0x68] sm:$0xff]
      %v185 = vld [vmem:[%s165 + $0x70] sm:$0xff]
      %v186 = vld [vmem:[%s165 + $0x78] sm:$0xff]
      %v187 = vld [vmem:[%s165 + $0x80] sm:$0xff]
      %v188 = vld [vmem:[%s165 + $0x88] sm:$0xff]
      %v189 = vld [vmem:[%s165 + $0x90] sm:$0xff]
      %v190 = vld [vmem:[%s165 + $0x98] sm:$0xff]
      %v191 = vld [vmem:[%s165 + $0xa0] sm:$0xff]
      %v192 = vld [vmem:[%s165 + $0xa8] sm:$0xff]
      %v193 = vld [vmem:[%s165 + $0xb0] sm:$0xff]
      %v194 = vld [vmem:[%s165 + $0xb8] sm:$0xff]
      %v195 = vld [vmem:[%s165 + $0xc0] sm:$0xff]
      %v196 = vld [vmem:[%s165 + $0xc8] sm:$0xff]
      %v197 = vld [vmem:[%s165 + $0xd0] sm:$0xff]
      %v198 = vld [vmem:[%s165 + $0xd8] sm:$0xff]
      %v199 = vld [vmem:[%s165 + $0xe0] sm:$0xff]
      %v200 = vld [vmem:[%s165 + $0xe8] sm:$0xff]
      %v201 = vld [vmem:[%s165 + $0xf0] sm:$0xff]
      %v202 = vld [vmem:[%s165 + $0xf8] sm:$0xff]
      %v203 = vld [vmem:[%s1] sm:$0x1]
      %v205 = vlaneseq
      %v206 = vshrl.u32 %v205, 7
      %v207 = vsub.s32 0, %v206
      %v208 = vrot.slane %v203, %v207
      %v210 = vmul.f32 %v171, %v208
      %v211 = vmul.f32 %v172, %v208
      %v212 = vmul.f32 %v173, %v208
      %v213 = vmul.f32 %v174, %v208
      %v214 = vmul.f32 %v175, %v208
      %v215 = vmul.f32 %v176, %v208
      %v216 = vmul.f32 %v177, %v208
      %v217 = vmul.f32 %v178, %v208
      %v218 = vmul.f32 %v179, %v208
      %v219 = vmul.f32 %v180, %v208
      %v220 = vmul.f32 %v181, %v208
      %v221 = vmul.f32 %v182, %v208
      %v222 = vmul.f32 %v183, %v208
      %v223 = vmul.f32 %v184, %v208
      %v224 = vmul.f32 %v185, %v208
      %v225 = vmul.f32 %v186, %v208
      %v226 = vmul.f32 %v187, %v208
      %v227 = vmul.f32 %v188, %v208
      %v228 = vmul.f32 %v189, %v208
      %v229 = vmul.f32 %v190, %v208
      %v230 = vmul.f32 %v191, %v208
      %v231 = vmul.f32 %v192, %v208
      %v232 = vmul.f32 %v193, %v208
      %v233 = vmul.f32 %v194, %v208
      %v234 = vmul.f32 %v195, %v208
      %v235 = vmul.f32 %v196, %v208
      %v236 = vmul.f32 %v197, %v208
      %v237 = vmul.f32 %v198, %v208
      %v238 = vmul.f32 %v199, %v208
      %v239 = vmul.f32 %v200, %v208
      %v240 = vmul.f32 %v201, %v208
      %v241 = vmul.f32 %v202, %v208
      %v242 = vld [vmem:[%s2] sm:$0x1]
      %v244 = vlaneseq
      %v245 = vshrl.u32 %v244, 7
      %v246 = vsub.s32 0, %v245
      %v247 = vrot.slane %v242, %v246
      %v249 = vadd.f32 %v210, %v247
      %v250 = vadd.f32 %v211, %v247
      %v251 = vadd.f32 %v212, %v247
      %v252 = vadd.f32 %v213, %v247
      %v253 = vadd.f32 %v214, %v247
      %v254 = vadd.f32 %v215, %v247
      %v255 = vadd.f32 %v216, %v247
      %v256 = vadd.f32 %v217, %v247
      %v257 = vadd.f32 %v218, %v247
      %v258 = vadd.f32 %v219, %v247
      %v259 = vadd.f32 %v220, %v247
      %v260 = vadd.f32 %v221, %v247
      %v261 = vadd.f32 %v222, %v247
      %v262 = vadd.f32 %v223, %v247
      %v263 = vadd.f32 %v224, %v247
      %v264 = vadd.f32 %v225, %v247
      %v265 = vadd.f32 %v226, %v247
      %v266 = vadd.f32 %v227, %v247
      %v267 = vadd.f32 %v228, %v247
      %v268 = vadd.f32 %v229, %v247
      %v269 = vadd.f32 %v230, %v247
      %v270 = vadd.f32 %v231, %v247
      %v271 = vadd.f32 %v232, %v247
      %v272 = vadd.f32 %v233, %v247
      %v273 = vadd.f32 %v234, %v247
      %v274 = vadd.f32 %v235, %v247
      %v275 = vadd.f32 %v236, %v247
      %v276 = vadd.f32 %v237, %v247
      %v277 = vadd.f32 %v238, %v247
      %v278 = vadd.f32 %v239, %v247
      %v279 = vadd.f32 %v240, %v247
      %v280 = vadd.f32 %v241, %v247
      %vm281 = vcmp.ge.f32.partialorder %v249, 0.0
      %vm282 = vcmp.ge.f32.partialorder %v250, 0.0
      %vm283 = vcmp.ge.f32.partialorder %v251, 0.0
      %vm284 = vcmp.ge.f32.partialorder %v252, 0.0
      %vm285 = vcmp.ge.f32.partialorder %v253, 0.0
      %vm286 = vcmp.ge.f32.partialorder %v254, 0.0
      %vm287 = vcmp.ge.f32.partialorder %v255, 0.0
      %vm288 = vcmp.ge.f32.partialorder %v256, 0.0
      %vm289 = vcmp.ge.f32.partialorder %v257, 0.0
      %vm290 = vcmp.ge.f32.partialorder %v258, 0.0
      %vm291 = vcmp.ge.f32.partialorder %v259, 0.0
      %vm292 = vcmp.ge.f32.partialorder %v260, 0.0
      %vm293 = vcmp.ge.f32.partialorder %v261, 0.0
      %vm294 = vcmp.ge.f32.partialorder %v262, 0.0
      %vm295 = vcmp.ge.f32.partialorder %v263, 0.0
      %vm296 = vcmp.ge.f32.partialorder %v264, 0.0
      %vm297 = vcmp.ge.f32.partialorder %v265, 0.0
      %vm298 = vcmp.ge.f32.partialorder %v266, 0.0
      %vm299 = vcmp.ge.f32.partialorder %v267, 0.0
      %vm300 = vcmp.ge.f32.partialorder %v268, 0.0
      %vm301 = vcmp.ge.f32.partialorder %v269, 0.0
      %vm302 = vcmp.ge.f32.partialorder %v270, 0.0
      %vm303 = vcmp.ge.f32.partialorder %v271, 0.0
      %vm304 = vcmp.ge.f32.partialorder %v272, 0.0
      %vm305 = vcmp.ge.f32.partialorder %v273, 0.0
      %vm306 = vcmp.ge.f32.partialorder %v274, 0.0
      %vm307 = vcmp.ge.f32.partialorder %v275, 0.0
      %vm308 = vcmp.ge.f32.partialorder %v276, 0.0
      %vm309 = vcmp.ge.f32.partialorder %v277, 0.0
      %vm310 = vcmp.ge.f32.partialorder %v278, 0.0
      %vm311 = vcmp.ge.f32.partialorder %v279, 0.0
      %vm312 = vcmp.ge.f32.partialorder %v280, 0.0
      %v313 = vmul.f32 %v249, 0.01
      %v314 = vmul.f32 %v250, 0.01
      %v315 = vmul.f32 %v251, 0.01
      %v316 = vmul.f32 %v252, 0.01
      %v317 = vmul.f32 %v253, 0.01
      %v318 = vmul.f32 %v254, 0.01
      %v319 = vmul.f32 %v255, 0.01
      %v320 = vmul.f32 %v256, 0.01
      %v321 = vmul.f32 %v257, 0.01
      %v322 = vmul.f32 %v258, 0.01
      %v323 = vmul.f32 %v259, 0.01
      %v324 = vmul.f32 %v260, 0.01
      %v325 = vmul.f32 %v261, 0.01
      %v326 = vmul.f32 %v262, 0.01
      %v327 = vmul.f32 %v263, 0.01
      %v328 = vmul.f32 %v264, 0.01
      %v329 = vmul.f32 %v265, 0.01
      %v330 = vmul.f32 %v266, 0.01
      %v331 = vmul.f32 %v267, 0.01
      %v332 = vmul.f32 %v268, 0.01
      %v333 = vmul.f32 %v269, 0.01
      %v334 = vmul.f32 %v270, 0.01
      %v335 = vmul.f32 %v271, 0.01
      %v336 = vmul.f32 %v272, 0.01
      %v337 = vmul.f32 %v273, 0.01
      %v338 = vmul.f32 %v274, 0.01
      %v339 = vmul.f32 %v275, 0.01
      %v340 = vmul.f32 %v276, 0.01
      %v341 = vmul.f32 %v277, 0.01
      %v342 = vmul.f32 %v278, 0.01
      %v343 = vmul.f32 %v279, 0.01
      %v344 = vmul.f32 %v280, 0.01
      %v345 = vsel %vm281, %v249, %v313
      %v346 = vsel %vm282, %v250, %v314
      %v347 = vsel %vm283, %v251, %v315
      %v348 = vsel %vm284, %v252, %v316
      %v349 = vsel %vm285, %v253, %v317
      %v350 = vsel %vm286, %v254, %v318
      %v351 = vsel %vm287, %v255, %v319
      %v352 = vsel %vm288, %v256, %v320
      %v353 = vsel %vm289, %v257, %v321
      %v354 = vsel %vm290, %v258, %v322
      %v355 = vsel %vm291, %v259, %v323
      %v356 = vsel %vm292, %v260, %v324
      %v357 = vsel %vm293, %v261, %v325
      %v358 = vsel %vm294, %v262, %v326
      %v359 = vsel %vm295, %v263, %v327
      %v360 = vsel %vm296, %v264, %v328
      %v361 = vsel %vm297, %v265, %v329
      %v362 = vsel %vm298, %v266, %v330
      %v363 = vsel %vm299, %v267, %v331
      %v364 = vsel %vm300, %v268, %v332
      %v365 = vsel %vm301, %v269, %v333
      %v366 = vsel %vm302, %v270, %v334
      %v367 = vsel %vm303, %v271, %v335
      %v368 = vsel %vm304, %v272, %v336
      %v369 = vsel %vm305, %v273, %v337
      %v370 = vsel %vm306, %v274, %v338
      %v371 = vsel %vm307, %v275, %v339
      %v372 = vsel %vm308, %v276, %v340
      %v373 = vsel %vm309, %v277, %v341
      %v374 = vsel %vm310, %v278, %v342
      %v375 = vsel %vm311, %v279, %v343
      %v376 = vsel %vm312, %v280, %v344
      %377 = vst [vmem:[%s170] sm:$0xff] %v345
      %378 = vst [vmem:[%s170 + $0x8] sm:$0xff] %v346
      %379 = vst [vmem:[%s170 + $0x10] sm:$0xff] %v347
      %380 = vst [vmem:[%s170 + $0x18] sm:$0xff] %v348
      %381 = vst [vmem:[%s170 + $0x20] sm:$0xff] %v349
      %382 = vst [vmem:[%s170 + $0x28] sm:$0xff] %v350
      %383 = vst [vmem:[%s170 + $0x30] sm:$0xff] %v351
      %384 = vst [vmem:[%s170 + $0x38] sm:$0xff] %v352
      %385 = vst [vmem:[%s170 + $0x40] sm:$0xff] %v353
      %386 = vst [vmem:[%s170 + $0x48] sm:$0xff] %v354
      %387 = vst [vmem:[%s170 + $0x50] sm:$0xff] %v355
      %388 = vst [vmem:[%s170 + $0x58] sm:$0xff] %v356
      %389 = vst [vmem:[%s170 + $0x60] sm:$0xff] %v357
      %390 = vst [vmem:[%s170 + $0x68] sm:$0xff] %v358
      %391 = vst [vmem:[%s170 + $0x70] sm:$0xff] %v359
      %392 = vst [vmem:[%s170 + $0x78] sm:$0xff] %v360
      %393 = vst [vmem:[%s170 + $0x80] sm:$0xff] %v361
      %394 = vst [vmem:[%s170 + $0x88] sm:$0xff] %v362
      %395 = vst [vmem:[%s170 + $0x90] sm:$0xff] %v363
      %396 = vst [vmem:[%s170 + $0x98] sm:$0xff] %v364
      %397 = vst [vmem:[%s170 + $0xa0] sm:$0xff] %v365
      %398 = vst [vmem:[%s170 + $0xa8] sm:$0xff] %v366
      %399 = vst [vmem:[%s170 + $0xb0] sm:$0xff] %v367
      %400 = vst [vmem:[%s170 + $0xb8] sm:$0xff] %v368
      %401 = vst [vmem:[%s170 + $0xc0] sm:$0xff] %v369
      %402 = vst [vmem:[%s170 + $0xc8] sm:$0xff] %v370
      %403 = vst [vmem:[%s170 + $0xd0] sm:$0xff] %v371
      %404 = vst [vmem:[%s170 + $0xd8] sm:$0xff] %v372
      %405 = vst [vmem:[%s170 + $0xe0] sm:$0xff] %v373
      %406 = vst [vmem:[%s170 + $0xe8] sm:$0xff] %v374
      %407 = vst [vmem:[%s170 + $0xf0] sm:$0xff] %v375
      %408 = vst [vmem:[%s170 + $0xf8] sm:$0xff] %v376
      %p409 = scmp.lt.s32.totalorder %s14, 1
      %s410 = scalar_select %p409, %s14, 1
      %s411 = smul.addr %s410, 32
      %s412 = smul.addr %s411, 8
      %s413 = scalar_lea.vmem %s3, %s412
      // Predicated region
      $region33: #{conv_up_bn_relu_forward.3} parent=31 // pred_check
        %p414 = pneg %p100
      $region34: #{conv_up_bn_relu_forward.3} parent=31 // pred_check_branch
        %416 = sbr.rel (%p414) target = $region36
      $region35: #{conv_up_bn_relu_forward.3} parent=31 // pred_region
        _
      $region36: #{conv_up_bn_relu_forward.3} parent=31 // pred_fallthru
        _
    $region32: #{conv_up_bn_relu_forward.3} parent=5 // pred_fallthru
      _
    %p417 = scmp.le.s32.totalorder 2, %s9
    // Predicated region
    $region37: #{conv_up_bn_relu_forward.3} parent=5 // pred_check
      %p418 = pneg %p417
    $region38: #{conv_up_bn_relu_forward.3} parent=5 // pred_check_branch
      %420 = sbr.rel (%p418) target = $region40
    $region39: #{conv_up_bn_relu_forward.3} parent=5 // pred_region
      %s421 = ssub.s32 %s9, 2
      // Predicated region
      $region41: #{conv_up_bn_relu_forward.3} parent=39 // pred_check
        %p422 = pneg %p106
      $region42: #{conv_up_bn_relu_forward.3} parent=39 // pred_check_branch
        %424 = sbr.rel (%p422) target = $region44
      $region43: #{conv_up_bn_relu_forward.3} parent=39 // pred_region
        %p425 = scmp.lt.s32.totalorder %s15, 1
        %s426 = scalar_select %p425, %s15, 1
        %s427 = smul.addr %s426, 32
        %s428 = smul.addr %s427, 8
        %s429 = scalar_lea.vmem %s3, %s428
      $region44: #{conv_up_bn_relu_forward.3} parent=39 // pred_fallthru
        _
    $region40: #{conv_up_bn_relu_forward.3} parent=5 // pred_fallthru
      _
  $region6: #{conv_up_bn_relu_forward.3} parent=0 // loop_footer
    %s13 = sadd.s32 1, %s9
  $region7: #{conv_up_bn_relu_forward.3} parent=0 // loop_footer_branch
    %8 = sbr.rel target = $region3
  $region8: #{conv_up_bn_relu_forward.3} parent=0 // loop_exit
    _

// kernel: conv_up_bn_relu_forward.2
$region0: #{conv_up_bn_relu_forward.2}
  #allocation0 [shape = 'u32[]', space=smem, size = 0x4, offset = 0x4, fixed_abs, tag = 'smem constant byte address 0x4 - core index']
  #allocation1 [shape = 'u32[144,128]{1,0:T(1,128)}', space=vmem, size = 0x12000, scoped, tag = 'internal scratch']
  %s0 = inlined_call_operand.vmem [shape: bf16[2,18,18,16], index: 0, kind: input, shape index: {}]
  %s1 = inlined_call_operand.vmem [shape: bf16[144,128], index: 1, kind: input, shape index: {}]
  %s2 = inlined_call_operand.vmem [shape: f32[2,256,128], index: 2, kind: output, shape index: {0}]
  %s3 = inlined_call_operand.vmem [shape: f32[2,2,128], index: 3, kind: output, shape index: {1}]
  %4 = xla_tuple %s2, %s3
  %s5 = sld [smem:[#allocation0]]
  $region49: #{conv_up_bn_relu_forward.2} parent=0
    _
  %s7 = ssub.s32 1, %s5
  %s8 = scalar_select 0, %s7, %s5
  loop: start=0, step=1, limit=4
  $region2: #{conv_up_bn_relu_forward.2} parent=0 // loop_pre_header
    _
  $region3: #{conv_up_bn_relu_forward.2} parent=0 // loop_header
    %s10 = sphi 0, %s14
    %p11 = scmp.ge.s32.totalorder %s10, 4
    %s20 = sphi 0, %s22
    %s23 = sphi 0, %s20
    %s24 = sphi 0, %s23
    %s40 = sphi 0, %s24
    %s44 = sphi 0, %s44
    %s46 = sphi 0, %s44
    %s47 = sphi 0, %s46
    %s61 = sphi 0, %s47
    %s67 = sphi 0, %s69
    %s70 = sphi 0, %s67
    %s71 = sphi 0, %s70
    %s87 = sphi 0, %s71
    %s93 = sphi 0, %s95
    %s96 = sphi 0, %s93
    %s97 = sphi 0, %s96
    %s113 = sphi 0, %s97
  $region4: #{conv_up_bn_relu_forward.2} parent=0 // loop_header_branch
    %13 = sbr.rel (%p11) target = $region8
  $region5: #{conv_up_bn_relu_forward.2} parent=0 // loop_body
    %s15 = ssub.s32 %s10, 1
    %s16 = ssub.s32 %s10, 2
    %s17 = sadd.s32 %s10, 1
    %s18 = ssub.s32 %s10, %s17
    %p19 = scmp.eq.s32.totalorder %s18, 0
    %s21 = sadd.s32 %s20, 1
    %s22 = scalar_select %p19, %s20, %s21
    %p25 = pneg %p19
    %p26 = scmp.eq.s32.totalorder %s10, 1
    %p27 = por %p25, %p26
    %p28 = scmp.ne.s32.totalorder %s20, %s23
    %p29 = scmp.eq.s32.totalorder %s10, 0
    %p30 = por %p28, %p29
    %p31 = scmp.ne.s32.totalorder %s20, %s23
    %p32 = scmp.eq.s32.totalorder %s15, 1
    %p33 = por %p31, %p32
    %p34 = scmp.ne.s32.totalorder %s23, %s24
    %p35 = scmp.eq.s32.totalorder %s15, 0
    %p36 = por %p34, %p35
    %p37 = scmp.ne.s32.totalorder %s23, %s24
    %p38 = scmp.eq.s32.totalorder %s16, 1
    %p39 = por %p37, %p38
    %p41 = scmp.ne.s32.totalorder %s24, %s40
    %p42 = scmp.eq.s32.totalorder %s16, 0
    %p43 = por %p41, %p42
    %s45 = sadd.s32 %s44, 1
    %p48 = scmp.eq.s32.totalorder %s10, 1
    %p49 = scmp.ne.s32.totalorder %s44, %s46
    %p50 = scmp.eq.s32.totalorder %s10, 0
    %p51 = por %p49, %p50
    %p52 = scmp.ne.s32.totalorder %s44, %s46
    %p53 = scmp.eq.s32.totalorder %s15, 1
    %p54 = por %p52, %p53
    %p55 = scmp.ne.s32.totalorder %s46, %s47
    %p56 = scmp.eq.s32.totalorder %s15, 0
    %p57 = por %p55, %p56
    %p58 = scmp.ne.s32.totalorder %s46, %s47
    %p59 = scmp.eq.s32.totalorder %s16, 1
    %p60 = por %p58, %p59
    %p62 = scmp.ne.s32.totalorder %s47, %s61
    %p63 = scmp.eq.s32.totalorder %s16, 0
    %p64 = por %p62, %p63
    %s65 = ssub.s32 %s10, %s17
    %p66 = scmp.eq.s32.totalorder %s65, 0
    %s68 = sadd.s32 %s67, 1
    %s69 = scalar_select %p66, %s67, %s68
    %p72 = pneg %p66
    %p73 = scmp.eq.s32.totalorder %s10, 1
    %p74 = por %p72, %p73
    %p75 = scmp.ne.s32.totalorder %s67, %s70
    %p76 = scmp.eq.s32.totalorder %s10, 0
    %p77 = por %p75, %p76
    %p78 = scmp.ne.s32.totalorder %s67, %s70
    %p79 = scmp.eq.s32.totalorder %s15, 1
    %p80 = por %p78, %p79
    %p81 = scmp.ne.s32.totalorder %s70, %s71
    %p82 = scmp.eq.s32.totalorder %s15, 0
    %p83 = por %p81, %p82
    %p84 = scmp.ne.s32.totalorder %s70, %s71
    %p85 = scmp.eq.s32.totalorder %s16, 1
    %p86 = por %p84, %p85
    %p88 = scmp.ne.s32.totalorder %s71, %s87
    %p89 = scmp.eq.s32.totalorder %s16, 0
    %p90 = por %p88, %p89
    %s91 = ssub.s32 %s10, %s17
    %p92 = scmp.eq.s32.totalorder %s91, 0
    %s94 = sadd.s32 %s93, 1
    %s95 = scalar_select %p92, %s93, %s94
    %p98 = pneg %p92
    %p99 = scmp.eq.s32.totalorder %s10, 1
    %p100 = por %p98, %p99
    %p101 = scmp.ne.s32.totalorder %s93, %s96
    %p102 = scmp.eq.s32.totalorder %s10, 0
    %p103 = por %p101, %p102
    %p104 = scmp.ne.s32.totalorder %s93, %s96
    %p105 = scmp.eq.s32.totalorder %s15, 1
    %p106 = por %p104, %p105
    %p107 = scmp.ne.s32.totalorder %s96, %s97
    %p108 = scmp.eq.s32.totalorder %s15, 0
    %p109 = por %p107, %p108
    %p110 = scmp.ne.s32.totalorder %s96, %s97
    %p111 = scmp.eq.s32.totalorder %s16, 1
    %p112 = por %p110, %p111
    %p114 = scmp.ne.s32.totalorder %s97, %s113
    %p115 = scmp.eq.s32.totalorder %s16, 0
    %p116 = por %p114, %p115
    %p117 = scmp.le.s32.totalorder 1, %s10
    %p118 = scmp.lt.s32.totalorder %s10, 3
    %p119 = pnand %p117, %p118
    %p120 = pneg %p119
    // Predicated region
    $region9: #{conv_up_bn_relu_forward.2} parent=5 // pred_check
      _
    $region10: #{conv_up_bn_relu_forward.2} parent=5 // pred_check_branch
      %122 = sbr.rel (%p119) target = $region12
    $region11: #{conv_up_bn_relu_forward.2} parent=5 // pred_region
      %s123 = ssub.s32 %s10, 1
      // Predicated region
      $region13: #{conv_up_bn_relu_forward.2} parent=11 // pred_check
        %p124 = pneg %p57
      $region14: #{conv_up_bn_relu_forward.2} parent=11 // pred_check_branch
        %126 = sbr.rel (%p124) target = $region16
      $region15: #{conv_up_bn_relu_forward.2} parent=11 // pred_region
        _
      $region16: #{conv_up_bn_relu_forward.2} parent=11 // pred_fallthru
        _
    $region12: #{conv_up_bn_relu_forward.2} parent=5 // pred_fallthru
      _
    %p127 = scmp.lt.s32.totalorder %s10, 2
    // Predicated region
    $region17: #{conv_up_bn_relu_forward.2} parent=5 // pred_check
      %p128 = pneg %p127
    $region18: #{conv_up_bn_relu_forward.2} parent=5 // pred_check_branch
      %130 = sbr.rel (%p128) target = $region20
    $region19: #{conv_up_bn_relu_forward.2} parent=5 // pred_region
      // Predicated region
      $region21: #{conv_up_bn_relu_forward.2} parent=19 // pred_check
        %p131 = pneg %p30
      $region22: #{conv_up_bn_relu_forward.2} parent=19 // pred_check_branch
        %133 = sbr.rel (%p131) target = $region24
      $region23: #{conv_up_bn_relu_forward.2} parent=19 // pred_region
        %p134 = scmp.lt.s32.totalorder %s10, 1
        %s135 = scalar_select %p134, %s10, 1
        %s136 = smul.addr %s135, 54
        %s137 = smul.addr %s136, 4
        %s138 = scalar_lea.vmem %s0, %s137
      $region24: #{conv_up_bn_relu_forward.2} parent=19 // pred_fallthru
        _
    $region20: #{conv_up_bn_relu_forward.2} parent=5 // pred_fallthru
      _
    %p139 = scmp.le.s32.totalorder 1, %s10
    %p140 = scmp.lt.s32.totalorder %s10, 3
    %p141 = pnand %p139, %p140
    %p142 = pneg %p141
    // Predicated region
    $region25: #{conv_up_bn_relu_forward.2} parent=5 // pred_check
      _
    $region26: #{conv_up_bn_relu_forward.2} parent=5 // pred_check_branch
      %144 = sbr.rel (%p141) target = $region28
    $region27: #{conv_up_bn_relu_forward.2} parent=5 // pred_region
      %s145 = ssub.s32 %s10, 1
      %p146 = scmp.lt.s32.totalorder %s15, 1
      %s147 = scalar_select %p146, %s15, 1
      %s148 = smul.addr %s147, 54
      %s149 = smul.addr %s148, 4
      %s150 = scalar_lea.vmem %s0, %s149
      %p151 = pneg %p36
      %p152 = pneg %p33
      %p153 = pneg %p57
      %p154 = pneg %p54
      %p155 = pneg %p83
      %p156 = pneg %p80
      %p157 = scmp.lt.s32.totalorder %s15, 1
      %s158 = scalar_select %p157, %s15, 1
      %s159 = smul.addr %s158, 32
      %s160 = smul.addr %s159, 8
      %s161 = scalar_lea.vmem %s2, %s160
      %p162 = pneg %p109
      %p163 = pneg %p106
      %p164 = scmp.lt.s32.totalorder %s15, 1
      %s165 = scalar_select %p164, %s15, 1
      %s166 = smul.addr %s165, 2
      %s167 = scalar_lea.vmem %s3, %s166
      %p168 = scmp.lt.s32.totalorder %s15, 1
      %s169 = scalar_select %p168, %s15, 1
      %s170 = smul.addr %s169, 54
      %s171 = smul.addr %s170, 4
      %s172 = scalar_lea.vmem %s0, %s171
      %p173 = scmp.lt.s32.totalorder %s15, 1
      %s174 = scalar_select %p173, %s15, 1
      %s175 = smul.addr %s174, 32
      %s176 = smul.addr %s175, 8
      %s177 = scalar_lea.vmem %s2, %s176
      %p178 = scmp.lt.s32.totalorder %s15, 1
      %s179 = scalar_select %p178, %s15, 1
      %s180 = smul.addr %s179, 2
      %s181 = scalar_lea.vmem %s3, %s180
      %v183 = vld [vmem:[%s172] sm:$0xf]
      %v184 = vld [vmem:[%s172 + $0x4] sm:$0xf]
      %v185 = vld [vmem:[%s172 + $0x8] sm:$0x1]
      %v186 = vld [vmem:[%s172 + $0xc] sm:$0xf]
      %v187 = vld [vmem:[%s172 + $0x10] sm:$0xf]
      %v188 = vld [vmem:[%s172 + $0x14] sm:$0x1]
      %v189 = vld [vmem:[%s172 + $0x18] sm:$0xf]
      %v190 = vld [vmem:[%s172 + $0x1c] sm:$0xf]
      %v191 = vld [vmem:[%s172 + $0x20] sm:$0x1]
      %v192 = vld [vmem:[%s172 + $0x24] sm:$0xf]
      %v193 = vld [vmem:[%s172 + $0x28] sm:$0xf]
      %v194 = vld [vmem:[%s172 + $0x2c] sm:$0x1]
      %v195 = vld [vmem:[%s172 + $0x30] sm:$0xf]
      %v196 = vld [vmem:[%s172 + $0x34] sm:$0xf]
      %v197 = vld [vmem:[%s172 + $0x38] sm:$0x1]
      %v198 = vld [vmem:[%s172 + $0x3c] sm:$0xf]
      %v199 = vld [vmem:[%s172 + $0x40] sm:$0xf]
      %v200 = vld [vmem:[%s172 + $0x44] sm:$0x1]
      %v201 = vld [vmem:[%s172 + $0x48] sm:$0xf]
      %v202 = vld [vmem:[%s172 + $0x4c] sm:$0xf]
      %v203 = vld [vmem:[%s172 + $0x50] sm:$0x1]
      %v204 = vld [vmem:[%s172 + $0x54] sm:$0xf]
      %v205 = vld [vmem:[%s172 + $0x58] sm:$0xf]
      %v206 = vld [vmem:[%s172 + $0x5c] sm:$0x1]
      %v207 = vld [vmem:[%s172 + $0x60] sm:$0xf]
      %v208 = vld [vmem:[%s172 + $0x64] sm:$0xf]
      %v209 = vld [vmem:[%s172 + $0x68] sm:$0x1]
      %v210 = vld [vmem:[%s172 + $0x6c] sm:$0xf]
      %v211 = vld [vmem:[%s172 + $0x70] sm:$0xf]
      %v212 = vld [vmem:[%s172 + $0x74] sm:$0x1]
      %v213 = vld [vmem:[%s172 + $0x78] sm:$0xf]
      %v214 = vld [vmem:[%s172 + $0x7c] sm:$0xf]
      %v215 = vld [vmem:[%s172 + $0x80] sm:$0x1]
      %v216 = vld [vmem:[%s172 + $0x84] sm:$0xf]
      %v217 = vld [vmem:[%s172 + $0x88] sm:$0xf]
      %v218 = vld [vmem:[%s172 + $0x8c] sm:$0x1]
      %v219 = vld [vmem:[%s172 + $0x90] sm:$0xf]
      %v220 = vld [vmem:[%s172 + $0x94] sm:$0xf]
      %v221 = vld [vmem:[%s172 + $0x98] sm:$0x1]
      %v222 = vld [vmem:[%s172 + $0x9c] sm:$0xf]
      %v223 = vld [vmem:[%s172 + $0xa0] sm:$0xf]
      %v224 = vld [vmem:[%s172 + $0xa4] sm:$0x1]
      %v225 = vld [vmem:[%s172 + $0xa8] sm:$0xf]
      %v226 = vld [vmem:[%s172 + $0xac] sm:$0xf]
      %v227 = vld [vmem:[%s172 + $0xb0] sm:$0x1]
      %v228 = vld [vmem:[%s172 + $0xb4] sm:$0xf]
      %v229 = vld [vmem:[%s172 + $0xb8] sm:$0xf]
      %v230 = vld [vmem:[%s172 + $0xbc] sm:$0x1]
      %v231 = vld [vmem:[%s172 + $0xc0] sm:$0xf]
      %v232 = vld [vmem:[%s172 + $0xc4] sm:$0xf]
      %v233 = vld [vmem:[%s172 + $0xc8] sm:$0x1]
      %v234 = vld [vmem:[%s172 + $0xcc] sm:$0xf]
      %v235 = vld [vmem:[%s172 + $0xd0] sm:$0xf]
      %v236 = vld [vmem:[%s172 + $0xd4] sm:$0x1]
      %v269 = vunpack.c.l.b16 %v183
      %v270 = vunpack.c.l.b16 %v184
      %v271 = vunpack.c.l.b16 %v186
      %v272 = vunpack.c.l.b16 %v187
      %v273 = vunpack.c.l.b16 %v189
      %v274 = vunpack.c.l.b16 %v190
      %v275 = vunpack.c.l.b16 %v192
      %v276 = vunpack.c.l.b16 %v193
      %v277 = vunpack.c.l.b16 %v195
      %v278 = vunpack.c.l.b16 %v196
      %v279 = vunpack.c.l.b16 %v198
      %v280 = vunpack.c.l.b16 %v199
      %v281 = vunpack.c.l.b16 %v201
      %v282 = vunpack.c.l.b16 %v202
      %v283 = vunpack.c.l.b16 %v204
      %v284 = vunpack.c.l.b16 %v205
      %v285 = vunpack.c.l.b16 %v207
      %v286 = vunpack.c.l.b16 %v208
      %v287 = vunpack.c.l.b16 %v210
      %v288 = vunpack.c.l.b16 %v211
      %v289 = vunpack.c.l.b16 %v213
      %v290 = vunpack.c.l.b16 %v214
      %v291 = vunpack.c.l.b16 %v216
      %v292 = vunpack.c.l.b16 %v217
      %v293 = vunpack.c.l.b16 %v219
      %v294 = vunpack.c.l.b16 %v220
      %v295 = vunpack.c.l.b16 %v222
      %v296 = vunpack.c.l.b16 %v223
      %v297 = vunpack.c.l.b16 %v225
      %v298 = vunpack.c.l.b16 %v226
      %v299 = vunpack.c.l.b16 %v228
      %v300 = vunpack.c.l.b16 %v229
      %v301 = vpack.c.b16 %v270, %v269
      %v302 = vpack.c.b16 %v272, %v271
      %v303 = vpack.c.b16 %v274, %v273
      %v304 = vpack.c.b16 %v276, %v275
      %v305 = vpack.c.b16 %v278, %v277
      %v306 = vpack.c.b16 %v280, %v279
      %v307 = vpack.c.b16 %v282, %v281
      %v308 = vpack.c.b16 %v284, %v283
      %v309 = vpack.c.b16 %v286, %v285
      %v310 = vpack.c.b16 %v288, %v287
      %v311 = vpack.c.b16 %v290, %v289
      %v312 = vpack.c.b16 %v292, %v291
      %v313 = vpack.c.b16 %v294, %v293
      %v314 = vpack.c.b16 %v296, %v295
      %v315 = vpack.c.b16 %v298, %v297
      %v316 = vpack.c.b16 %v300, %v299
      %v333 = vunpack.c.l.b16 %v185
      %v334 = vunpack.c.l.b16 %v188
      %v335 = vunpack.c.l.b16 %v191
      %v336 = vunpack.c.l.b16 %v194
      %v337 = vunpack.c.l.b16 %v197
      %v338 = vunpack.c.l.b16 %v200
      %v339 = vunpack.c.l.b16 %v203
      %v340 = vunpack.c.l.b16 %v206
      %v341 = vunpack.c.l.b16 %v209
      %v342 = vunpack.c.l.b16 %v212
      %v343 = vunpack.c.l.b16 %v215
      %v344 = vunpack.c.l.b16 %v218
      %v345 = vunpack.c.l.b16 %v221
      %v346 = vunpack.c.l.b16 %v224
      %v347 = vunpack.c.l.b16 %v227
      %v348 = vunpack.c.l.b16 %v230
      %v349 = vpack.c.b16 %v333, %v333
      %v350 = vpack.c.b16 %v334, %v334
      %v351 = vpack.c.b16 %v335, %v335
      %v352 = vpack.c.b16 %v336, %v336
      %v353 = vpack.c.b16 %v337, %v337
      %v354 = vpack.c.b16 %v338, %v338
      %v355 = vpack.c.b16 %v339, %v339
      %v356 = vpack.c.b16 %v340, %v340
      %v357 = vpack.c.b16 %v341, %v341
      %v358 = vpack.c.b16 %v342, %v342
      %v359 = vpack.c.b16 %v343, %v343
      %v360 = vpack.c.b16 %v344, %v344
      %v361 = vpack.c.b16 %v345, %v345
      %v362 = vpack.c.b16 %v346, %v346
      %v363 = vpack.c.b16 %v347, %v347
      %v364 = vpack.c.b16 %v348, %v348
      %vm365 = vsmask.f32 7424
      %v367 = vshrl.u32 %v301, 16
      %v369 = vshll.u32 %v301, 16
      %v371 = vrot.slane %v369, 1
      %v372 = vor.u32 %v367, %v371
      %v374 = vshll.u32 %v349, 16
      %v376 = vrot.slane %v374, 1
      %v377 = vsel %vm365, %v372, %v376
      %v379 = vshrl.u32 %v302, 16
      %v381 = vshll.u32 %v302, 16
      %v383 = vrot.slane %v381, 1
      %v384 = vor.u32 %v379, %v383
      %v386 = vshll.u32 %v350, 16
      %v388 = vrot.slane %v386, 1
      %v389 = vsel %vm365, %v384, %v388
      %v391 = vshrl.u32 %v303, 16
      %v393 = vshll.u32 %v303, 16
      %v395 = vrot.slane %v393, 1
      %v396 = vor.u32 %v391, %v395
      %v398 = vshll.u32 %v351, 16
      %v400 = vrot.slane %v398, 1
      %v401 = vsel %vm365, %v396, %v400
      %v403 = vshrl.u32 %v304, 16
      %v405 = vshll.u32 %v304, 16
      %v407 = vrot.slane %v405, 1
      %v408 = vor.u32 %v403, %v407
      %v410 = vshll.u32 %v352, 16
      %v412 = vrot.slane %v410, 1
      %v413 = vsel %vm365, %v408, %v412
      %v415 = vshrl.u32 %v305, 16
      %v417 = vshll.u32 %v305, 16
      %v419 = vrot.slane %v417, 1
      %v420 = vor.u32 %v415, %v419
      %v422 = vshll.u32 %v353, 16
      %v424 = vrot.slane %v422, 1
      %v425 = vsel %vm365, %v420, %v424
      %v427 = vshrl.u32 %v306, 16
      %v429 = vshll.u32 %v306, 16
      %v431 = vrot.slane %v429, 1
      %v432 = vor.u32 %v427, %v431
      %v434 = vshll.u32 %v354, 16
      %v436 = vrot.slane %v434, 1
      %v437 = vsel %vm365, %v432, %v436
      %v439 = vshrl.u32 %v307, 16
      %v441 = vshll.u32 %v307, 16
      %v443 = vrot.slane %v441, 1
      %v444 = vor.u32 %v439, %v443
      %v446 = vshll.u32 %v355, 16
      %v448 = vrot.slane %v446, 1
      %v449 = vsel %vm365, %v444, %v448
      %v451 = vshrl.u32 %v308, 16
      %v453 = vshll.u32 %v308, 16
      %v455 = vrot.slane %v453, 1
      %v456 = vor.u32 %v451, %v455
      %v458 = vshll.u32 %v356, 16
      %v460 = vrot.slane %v458, 1
      %v461 = vsel %vm365, %v456, %v460
      %v463 = vshrl.u32 %v309, 16
      %v465 = vshll.u32 %v309, 16
      %v467 = vrot.slane %v465, 1
      %v468 = vor.u32 %v463, %v467
      %v470 = vshll.u32 %v357, 16
      %v472 = vrot.slane %v470, 1
      %v473 = vsel %vm365, %v468, %v472
      %v475 = vshrl.u32 %v310, 16
      %v477 = vshll.u32 %v310, 16
      %v479 = vrot.slane %v477, 1
      %v480 = vor.u32 %v475, %v479
      %v482 = vshll.u32 %v358, 16
      %v484 = vrot.slane %v482, 1
      %v485 = vsel %vm365, %v480, %v484
      %v487 = vshrl.u32 %v311, 16
      %v489 = vshll.u32 %v311, 16
      %v491 = vrot.slane %v489, 1
      %v492 = vor.u32 %v487, %v491
      %v494 = vshll.u32 %v359, 16
      %v496 = vrot.slane %v494, 1
      %v497 = vsel %vm365, %v492, %v496
      %v499 = vshrl.u32 %v312, 16
      %v501 = vshll.u32 %v312, 16
      %v503 = vrot.slane %v501, 1
      %v504 = vor.u32 %v499, %v503
      %v506 = vshll.u32 %v360, 16
      %v508 = vrot.slane %v506, 1
      %v509 = vsel %vm365, %v504, %v508
      %v511 = vshrl.u32 %v313, 16
      %v513 = vshll.u32 %v313, 16
      %v515 = vrot.slane %v513, 1
      %v516 = vor.u32 %v511, %v515
      %v518 = vshll.u32 %v361, 16
      %v520 = vrot.slane %v518, 1
      %v521 = vsel %vm365, %v516, %v520
      %v523 = vshrl.u32 %v314, 16
      %v525 = vshll.u32 %v314, 16
      %v527 = vrot.slane %v525, 1
      %v528 = vor.u32 %v523, %v527
      %v530 = vshll.u32 %v362, 16
      %v532 = vrot.slane %v530, 1
      %v533 = vsel %vm365, %v528, %v532
      %v535 = vshrl.u32 %v315, 16
      %v537 = vshll.u32 %v315, 16
      %v539 = vrot.slane %v537, 1
      %v540 = vor.u32 %v535, %v539
      %v542 = vshll.u32 %v363, 16
      %v544 = vrot.slane %v542, 1
      %v545 = vsel %vm365, %v540, %v544
      %v547 = vshrl.u32 %v316, 16
      %v549 = vshll.u32 %v316, 16
      %v551 = vrot.slane %v549, 1
      %v552 = vor.u32 %v547, %v551
      %v554 = vshll.u32 %v364, 16
      %v556 = vrot.slane %v554, 1
      %v557 = vsel %vm365, %v552, %v556
      %558 = vrot.lane.b32.xlu0 %v377, 16
      %v559 = vpop.permute.xlu0 %558
      %560 = vrot.lane.b32.xlu0 %v389, 16
      %v561 = vpop.permute.xlu0 %560
      %562 = vrot.lane.b32.xlu0 %v401, 16
      %v563 = vpop.permute.xlu0 %562
      %564 = vrot.lane.b32.xlu0 %v413, 16
      %v565 = vpop.permute.xlu0 %564
      %566 = vrot.lane.b32.xlu0 %v425, 16
      %v567 = vpop.permute.xlu0 %566
      %568 = vrot.lane.b32.xlu0 %v437, 16
      %v569 = vpop.permute.xlu0 %568
      %570 = vrot.lane.b32.xlu0 %v449, 16
      %v571 = vpop.permute.xlu0 %570
      %572 = vrot.lane.b32.xlu0 %v461, 16
      %v573 = vpop.permute.xlu0 %572
      %574 = vrot.lane.b32.xlu0 %v473, 16
      %v575 = vpop.permute.xlu0 %574
      %576 = vrot.lane.b32.xlu0 %v485, 16
      %v577 = vpop.permute.xlu0 %576
      %578 = vrot.lane.b32.xlu0 %v497, 16
      %v579 = vpop.permute.xlu0 %578
      %580 = vrot.lane.b32.xlu0 %v509, 16
      %v581 = vpop.permute.xlu0 %580
      %582 = vrot.lane.b32.xlu0 %v521, 16
      %v583 = vpop.permute.xlu0 %582
      %584 = vrot.lane.b32.xlu0 %v533, 16
      %v585 = vpop.permute.xlu0 %584
      %586 = vrot.lane.b32.xlu0 %v545, 16
      %v587 = vpop.permute.xlu0 %586
      %588 = vrot.lane.b32.xlu0 %v557, 16
      %v589 = vpop.permute.xlu0 %588
      %vm590 = vcmask 1046528
      %v591 = vrot.slane %v301, 1
      %v592 = vrot.slane %v349, 1
      %v593 = vsel %vm590, %v591, %v592
      %v594 = vrot.slane %v302, 1
      %v595 = vrot.slane %v350, 1
      %v596 = vsel %vm590, %v594, %v595
      %v597 = vrot.slane %v303, 1
      %v598 = vrot.slane %v351, 1
      %v599 = vsel %vm590, %v597, %v598
      %v600 = vrot.slane %v304, 1
      %v601 = vrot.slane %v352, 1
      %v602 = vsel %vm590, %v600, %v601
      %v603 = vrot.slane %v305, 1
      %v604 = vrot.slane %v353, 1
      %v605 = vsel %vm590, %v603, %v604
      %v606 = vrot.slane %v306, 1
      %v607 = vrot.slane %v354, 1
      %v608 = vsel %vm590, %v606, %v607
      %v609 = vrot.slane %v307, 1
      %v610 = vrot.slane %v355, 1
      %v611 = vsel %vm590, %v609, %v610
      %v612 = vrot.slane %v308, 1
      %v613 = vrot.slane %v356, 1
      %v614 = vsel %vm590, %v612, %v613
      %v615 = vrot.slane %v309, 1
      %v616 = vrot.slane %v357, 1
      %v617 = vsel %vm590, %v615, %v616
      %v618 = vrot.slane %v310, 1
      %v619 = vrot.slane %v358, 1
      %v620 = vsel %vm590, %v618, %v619
      %v621 = vrot.slane %v311, 1
      %v622 = vrot.slane %v359, 1
      %v623 = vsel %vm590, %v621, %v622
      %v624 = vrot.slane %v312, 1
      %v625 = vrot.slane %v360, 1
      %v626 = vsel %vm590, %v624, %v625
      %v627 = vrot.slane %v313, 1
      %v628 = vrot.slane %v361, 1
      %v629 = vsel %vm590, %v627, %v628
      %v630 = vrot.slane %v314, 1
      %v631 = vrot.slane %v362, 1
      %v632 = vsel %vm590, %v630, %v631
      %v633 = vrot.slane %v315, 1
      %v634 = vrot.slane %v363, 1
      %v635 = vsel %vm590, %v633, %v634
      %v636 = vrot.slane %v316, 1
      %v637 = vrot.slane %v364, 1
      %v638 = vsel %vm590, %v636, %v637
      %639 = vrot.lane.b32.xlu0 %v593, 32
      %v640 = vpop.permute.xlu0 %639
      %641 = vrot.lane.b32.xlu0 %v596, 32
      %v642 = vpop.permute.xlu0 %641
      %643 = vrot.lane.b32.xlu0 %v599, 32
      %v644 = vpop.permute.xlu0 %643
      %645 = vrot.lane.b32.xlu0 %v602, 32
      %v646 = vpop.permute.xlu0 %645
      %647 = vrot.lane.b32.xlu0 %v605, 32
      %v648 = vpop.permute.xlu0 %647
      %649 = vrot.lane.b32.xlu0 %v608, 32
      %v650 = vpop.permute.xlu0 %649
      %651 = vrot.lane.b32.xlu0 %v611, 32
      %v652 = vpop.permute.xlu0 %651
      %653 = vrot.lane.b32.xlu0 %v614, 32
      %v654 = vpop.permute.xlu0 %653
      %655 = vrot.lane.b32.xlu0 %v617, 32
      %v656 = vpop.permute.xlu0 %655
      %657 = vrot.lane.b32.xlu0 %v620, 32
      %v658 = vpop.permute.xlu0 %657
      %659 = vrot.lane.b32.xlu0 %v623, 32
      %v660 = vpop.permute.xlu0 %659
      %661 = vrot.lane.b32.xlu0 %v626, 32
      %v662 = vpop.permute.xlu0 %661
      %663 = vrot.lane.b32.xlu0 %v629, 32
      %v664 = vpop.permute.xlu0 %663
      %665 = vrot.lane.b32.xlu0 %v632, 32
      %v666 = vpop.permute.xlu0 %665
      %667 = vrot.lane.b32.xlu0 %v635, 32
      %v668 = vpop.permute.xlu0 %667
      %669 = vrot.lane.b32.xlu0 %v638, 32
      %v670 = vpop.permute.xlu0 %669
      %v673 = vunpack.c.l.b16 %v231
      %v674 = vunpack.c.l.b16 %v232
      %v675 = vpack.c.b16 %v674, %v673
      %676 = vrot.lane.b32.xlu0 %v302, 48
      %v677 = vpop.permute.xlu0 %676
      %678 = vrot.lane.b32.xlu0 %v303, 48
      %v679 = vpop.permute.xlu0 %678
      %680 = vrot.lane.b32.xlu0 %v304, 48
      %v681 = vpop.permute.xlu0 %680
      %682 = vrot.lane.b32.xlu0 %v305, 48
      %v683 = vpop.permute.xlu0 %682
      %684 = vrot.lane.b32.xlu0 %v306, 48
      %v685 = vpop.permute.xlu0 %684
      %686 = vrot.lane.b32.xlu0 %v307, 48
      %v687 = vpop.permute.xlu0 %686
      %688 = vrot.lane.b32.xlu0 %v308, 48
      %v689 = vpop.permute.xlu0 %688
      %690 = vrot.lane.b32.xlu0 %v309, 48
      %v691 = vpop.permute.xlu0 %690
      %692 = vrot.lane.b32.xlu0 %v310, 48
      %v693 = vpop.permute.xlu0 %692
      %694 = vrot.lane.b32.xlu0 %v311, 48
      %v695 = vpop.permute.xlu0 %694
      %696 = vrot.lane.b32.xlu0 %v312, 48
      %v697 = vpop.permute.xlu0 %696
      %698 = vrot.lane.b32.xlu0 %v313, 48
      %v699 = vpop.permute.xlu0 %698
      %700 = vrot.lane.b32.xlu0 %v314, 48
      %v701 = vpop.permute.xlu0 %700
      %702 = vrot.lane.b32.xlu0 %v315, 48
      %v703 = vpop.permute.xlu0 %702
      %704 = vrot.lane.b32.xlu0 %v316, 48
      %v705 = vpop.permute.xlu0 %704
      %706 = vrot.lane.b32.xlu0 %v675, 48
      %v707 = vpop.permute.xlu0 %706
      %v709 = vunpack.c.l.b16 %v233
      %v710 = vpack.c.b16 %v709, %v709
      %v712 = vshrl.u32 %v675, 16
      %v714 = vshll.u32 %v675, 16
      %v716 = vrot.slane %v714, 1
      %v717 = vor.u32 %v712, %v716
      %v719 = vshll.u32 %v710, 16
      %v721 = vrot.slane %v719, 1
      %v722 = vsel %vm365, %v717, %v721
      %723 = vrot.lane.b32.xlu0 %v389, 64
      %v724 = vpop.permute.xlu0 %723
      %725 = vrot.lane.b32.xlu0 %v401, 64
      %v726 = vpop.permute.xlu0 %725
      %727 = vrot.lane.b32.xlu0 %v413, 64
      %v728 = vpop.permute.xlu0 %727
      %729 = vrot.lane.b32.xlu0 %v425, 64
      %v730 = vpop.permute.xlu0 %729
      %731 = vrot.lane.b32.xlu0 %v437, 64
      %v732 = vpop.permute.xlu0 %731
      %733 = vrot.lane.b32.xlu0 %v449, 64
      %v734 = vpop.permute.xlu0 %733
      %735 = vrot.lane.b32.xlu0 %v461, 64
      %v736 = vpop.permute.xlu0 %735
      %737 = vrot.lane.b32.xlu0 %v473, 64
      %v738 = vpop.permute.xlu0 %737
      %739 = vrot.lane.b32.xlu0 %v485, 64
      %v740 = vpop.permute.xlu0 %739
      %741 = vrot.lane.b32.xlu0 %v497, 64
      %v742 = vpop.permute.xlu0 %741
      %743 = vrot.lane.b32.xlu0 %v509, 64
      %v744 = vpop.permute.xlu0 %743
      %745 = vrot.lane.b32.xlu0 %v521, 64
      %v746 = vpop.permute.xlu0 %745
      %747 = vrot.lane.b32.xlu0 %v533, 64
      %v748 = vpop.permute.xlu0 %747
      %749 = vrot.lane.b32.xlu0 %v545, 64
      %v750 = vpop.permute.xlu0 %749
      %751 = vrot.lane.b32.xlu0 %v557, 64
      %v752 = vpop.permute.xlu0 %751
      %753 = vrot.lane.b32.xlu0 %v722, 64
      %v754 = vpop.permute.xlu0 %753
      %v755 = vrot.slane %v675, 1
      %v756 = vrot.slane %v710, 1
      %v757 = vsel %vm590, %v755, %v756
      %758 = vrot.lane.b32.xlu0 %v596, 80
      %v759 = vpop.permute.xlu0 %758
      %760 = vrot.lane.b32.xlu0 %v599, 80
      %v761 = vpop.permute.xlu0 %760
      %762 = vrot.lane.b32.xlu0 %v602, 80
      %v763 = vpop.permute.xlu0 %762
      %764 = vrot.lane.b32.xlu0 %v605, 80
      %v765 = vpop.permute.xlu0 %764
      %766 = vrot.lane.b32.xlu0 %v608, 80
      %v767 = vpop.permute.xlu0 %766
      %768 = vrot.lane.b32.xlu0 %v611, 80
      %v769 = vpop.permute.xlu0 %768
      %770 = vrot.lane.b32.xlu0 %v614, 80
      %v771 = vpop.permute.xlu0 %770
      %772 = vrot.lane.b32.xlu0 %v617, 80
      %v773 = vpop.permute.xlu0 %772
      %774 = vrot.lane.b32.xlu0 %v620, 80
      %v775 = vpop.permute.xlu0 %774
      %776 = vrot.lane.b32.xlu0 %v623, 80
      %v777 = vpop.permute.xlu0 %776
      %778 = vrot.lane.b32.xlu0 %v626, 80
      %v779 = vpop.permute.xlu0 %778
      %780 = vrot.lane.b32.xlu0 %v629, 80
      %v781 = vpop.permute.xlu0 %780
      %782 = vrot.lane.b32.xlu0 %v632, 80
      %v783 = vpop.permute.xlu0 %782
      %784 = vrot.lane.b32.xlu0 %v635, 80
      %v785 = vpop.permute.xlu0 %784
      %786 = vrot.lane.b32.xlu0 %v638, 80
      %v787 = vpop.permute.xlu0 %786
      %788 = vrot.lane.b32.xlu0 %v757, 80
      %v789 = vpop.permute.xlu0 %788
      %v792 = vunpack.c.l.b16 %v234
      %v793 = vunpack.c.l.b16 %v235
      %v794 = vpack.c.b16 %v793, %v792
      %795 = vrot.lane.b32.xlu0 %v303, 96
      %v796 = vpop.permute.xlu0 %795
      %797 = vrot.lane.b32.xlu0 %v304, 96
      %v798 = vpop.permute.xlu0 %797
      %799 = vrot.lane.b32.xlu0 %v305, 96
      %v800 = vpop.permute.xlu0 %799
      %801 = vrot.lane.b32.xlu0 %v306, 96
      %v802 = vpop.permute.xlu0 %801
      %803 = vrot.lane.b32.xlu0 %v307, 96
      %v804 = vpop.permute.xlu0 %803
      %805 = vrot.lane.b32.xlu0 %v308, 96
      %v806 = vpop.permute.xlu0 %805
      %807 = vrot.lane.b32.xlu0 %v309, 96
      %v808 = vpop.permute.xlu0 %807
      %809 = vrot.lane.b32.xlu0 %v310, 96
      %v810 = vpop.permute.xlu0 %809
      %811 = vrot.lane.b32.xlu0 %v311, 96
      %v812 = vpop.permute.xlu0 %811
      %813 = vrot.lane.b32.xlu0 %v312, 96
      %v814 = vpop.permute.xlu0 %813
      %815 = vrot.lane.b32.xlu0 %v313, 96
      %v816 = vpop.permute.xlu0 %815
      %817 = vrot.lane.b32.xlu0 %v314, 96
      %v818 = vpop.permute.xlu0 %817
      %819 = vrot.lane.b32.xlu0 %v315, 96
      %v820 = vpop.permute.xlu0 %819
      %821 = vrot.lane.b32.xlu0 %v316, 96
      %v822 = vpop.permute.xlu0 %821
      %823 = vrot.lane.b32.xlu0 %v675, 96
      %v824 = vpop.permute.xlu0 %823
      %825 = vrot.lane.b32.xlu0 %v794, 96
      %v826 = vpop.permute.xlu0 %825
      %v828 = vunpack.c.l.b16 %v236
      %v829 = vpack.c.b16 %v828, %v828
      %v831 = vshrl.u32 %v794, 16
      %v833 = vshll.u32 %v794, 16
      %v835 = vrot.slane %v833, 1
      %v836 = vor.u32 %v831, %v835
      %v838 = vshll.u32 %v829, 16
      %v840 = vrot.slane %v838, 1
      %v841 = vsel %vm365, %v836, %v840
      %842 = vrot.lane.b32.xlu0 %v401, 112
      %v843 = vpop.permute.xlu0 %842
      %844 = vrot.lane.b32.xlu0 %v413, 112
      %v845 = vpop.permute.xlu0 %844
      %846 = vrot.lane.b32.xlu0 %v425, 112
      %v847 = vpop.permute.xlu0 %846
      %848 = vrot.lane.b32.xlu0 %v437, 112
      %v849 = vpop.permute.xlu0 %848
      %850 = vrot.lane.b32.xlu0 %v449, 112
      %v851 = vpop.permute.xlu0 %850
      %852 = vrot.lane.b32.xlu0 %v461, 112
      %v853 = vpop.permute.xlu0 %852
      %854 = vrot.lane.b32.xlu0 %v473, 112
      %v855 = vpop.permute.xlu0 %854
      %856 = vrot.lane.b32.xlu0 %v485, 112
      %v857 = vpop.permute.xlu0 %856
      %858 = vrot.lane.b32.xlu0 %v497, 112
      %v859 = vpop.permute.xlu0 %858
      %860 = vrot.lane.b32.xlu0 %v509, 112
      %v861 = vpop.permute.xlu0 %860
      %862 = vrot.lane.b32.xlu0 %v521, 112
      %v863 = vpop.permute.xlu0 %862
      %864 = vrot.lane.b32.xlu0 %v533, 112
      %v865 = vpop.permute.xlu0 %864
      %866 = vrot.lane.b32.xlu0 %v545, 112
      %v867 = vpop.permute.xlu0 %866
      %868 = vrot.lane.b32.xlu0 %v557, 112
      %v869 = vpop.permute.xlu0 %868
      %870 = vrot.lane.b32.xlu0 %v722, 112
      %v871 = vpop.permute.xlu0 %870
      %872 = vrot.lane.b32.xlu0 %v841, 112
      %v873 = vpop.permute.xlu0 %872
      %v874 = vrot.slane %v794, 1
      %v875 = vrot.slane %v829, 1
      %v876 = vsel %vm590, %v874, %v875
      %vm877 = vcmask 130048
      %v879 = vsel %vm877, %v301, %v559
      %v881 = vsel %vm877, %v302, %v561
      %v883 = vsel %vm877, %v303, %v563
      %v885 = vsel %vm877, %v304, %v565
      %v887 = vsel %vm877, %v305, %v567
      %v889 = vsel %vm877, %v306, %v569
      %v891 = vsel %vm877, %v307, %v571
      %v893 = vsel %vm877, %v308, %v573
      %v895 = vsel %vm877, %v309, %v575
      %v897 = vsel %vm877, %v310, %v577
      %v899 = vsel %vm877, %v311, %v579
      %v901 = vsel %vm877, %v312, %v581
      %v903 = vsel %vm877, %v313, %v583
      %v905 = vsel %vm877, %v314, %v585
      %v907 = vsel %vm877, %v315, %v587
      %v909 = vsel %vm877, %v316, %v589
      %vm910 = vcmask 261120
      %v912 = vsel %vm910, %v879, %v640
      %v914 = vsel %vm910, %v881, %v642
      %v916 = vsel %vm910, %v883, %v644
      %v918 = vsel %vm910, %v885, %v646
      %v920 = vsel %vm910, %v887, %v648
      %v922 = vsel %vm910, %v889, %v650
      %v924 = vsel %vm910, %v891, %v652
      %v926 = vsel %vm910, %v893, %v654
      %v928 = vsel %vm910, %v895, %v656
      %v930 = vsel %vm910, %v897, %v658
      %v932 = vsel %vm910, %v899, %v660
      %v934 = vsel %vm910, %v901, %v662
      %v936 = vsel %vm910, %v903, %v664
      %v938 = vsel %vm910, %v905, %v666
      %v940 = vsel %vm910, %v907, %v668
      %v942 = vsel %vm910, %v909, %v670
      %vm943 = vcmask 392192
      %v945 = vsel %vm943, %v912, %v677
      %v947 = vsel %vm943, %v914, %v679
      %v949 = vsel %vm943, %v916, %v681
      %v951 = vsel %vm943, %v918, %v683
      %v953 = vsel %vm943, %v920, %v685
      %v955 = vsel %vm943, %v922, %v687
      %v957 = vsel %vm943, %v924, %v689
      %v959 = vsel %vm943, %v926, %v691
      %v961 = vsel %vm943, %v928, %v693
      %v963 = vsel %vm943, %v930, %v695
      %v965 = vsel %vm943, %v932, %v697
      %v967 = vsel %vm943, %v934, %v699
      %v969 = vsel %vm943, %v936, %v701
      %v971 = vsel %vm943, %v938, %v703
      %v973 = vsel %vm943, %v940, %v705
      %v975 = vsel %vm943, %v942, %v707
      %vm976 = vcmask 523264
      %v978 = vsel %vm976, %v945, %v724
      %v980 = vsel %vm976, %v947, %v726
      %v982 = vsel %vm976, %v949, %v728
      %v984 = vsel %vm976, %v951, %v730
      %v986 = vsel %vm976, %v953, %v732
      %v988 = vsel %vm976, %v955, %v734
      %v990 = vsel %vm976, %v957, %v736
      %v992 = vsel %vm976, %v959, %v738
      %v994 = vsel %vm976, %v961, %v740
      %v996 = vsel %vm976, %v963, %v742
      %v998 = vsel %vm976, %v965, %v744
      %v1000 = vsel %vm976, %v967, %v746
      %v1002 = vsel %vm976, %v969, %v748
      %v1004 = vsel %vm976, %v971, %v750
      %v1006 = vsel %vm976, %v973, %v752
      %v1008 = vsel %vm976, %v975, %v754
      %vm1009 = vcmask 654336
      %v1011 = vsel %vm1009, %v978, %v759
      %v1013 = vsel %vm1009, %v980, %v761
      %v1015 = vsel %vm1009, %v982, %v763
      %v1017 = vsel %vm1009, %v984, %v765
      %v1019 = vsel %vm1009, %v986, %v767
      %v1021 = vsel %vm1009, %v988, %v769
      %v1023 = vsel %vm1009, %v990, %v771
      %v1025 = vsel %vm1009, %v992, %v773
      %v1027 = vsel %vm1009, %v994, %v775
      %v1029 = vsel %vm1009, %v996, %v777
      %v1031 = vsel %vm1009, %v998, %v779
      %v1033 = vsel %vm1009, %v1000, %v781
      %v1035 = vsel %vm1009, %v1002, %v783
      %v1037 = vsel %vm1009, %v1004, %v785
      %v1039 = vsel %vm1009, %v1006, %v787
      %v1041 = vsel %vm1009, %v1008, %v789
      %vm1042 = vcmask 785408
      %v1044 = vsel %vm1042, %v1011, %v796
      %v1046 = vsel %vm1042, %v1013, %v798
      %v1048 = vsel %vm1042, %v1015, %v800
      %v1050 = vsel %vm1042, %v1017, %v802
      %v1052 = vsel %vm1042, %v1019, %v804
      %v1054 = vsel %vm1042, %v1021, %v806
      %v1056 = vsel %vm1042, %v1023, %v808
      %v1058 = vsel %vm1042, %v1025, %v810
      %v1060 = vsel %vm1042, %v1027, %v812
      %v1062 = vsel %vm1042, %v1029, %v814
      %v1064 = vsel %vm1042, %v1031, %v816
      %v1066 = vsel %vm1042, %v1033, %v818
      %v1068 = vsel %vm1042, %v1035, %v820
      %v1070 = vsel %vm1042, %v1037, %v822
      %v1072 = vsel %vm1042, %v1039, %v824
      %v1074 = vsel %vm1042, %v1041, %v826
      %vm1075 = vcmask 916480
      %v1077 = vsel %vm1075, %v1044, %v843
      %v1080 = vsel %vm1075, %v1046, %v845
      %v1083 = vsel %vm1075, %v1048, %v847
      %v1086 = vsel %vm1075, %v1050, %v849
      %v1089 = vsel %vm1075, %v1052, %v851
      %v1092 = vsel %vm1075, %v1054, %v853
      %v1095 = vsel %vm1075, %v1056, %v855
      %v1098 = vsel %vm1075, %v1058, %v857
      %v1101 = vsel %vm1075, %v1060, %v859
      %v1104 = vsel %vm1075, %v1062, %v861
      %v1107 = vsel %vm1075, %v1064, %v863
      %v1110 = vsel %vm1075, %v1066, %v865
      %v1113 = vsel %vm1075, %v1068, %v867
      %v1116 = vsel %vm1075, %v1070, %v869
      %v1119 = vsel %vm1075, %v1072, %v871
      %v1122 = vsel %vm1075, %v1074, %v873
      %v1124 = vld [vmem:[%s1] sm:$0xf]
      %v1125 = vld [vmem:[%s1 + $0x4] sm:$0xf]
      %v1126 = vld [vmem:[%s1 + $0x8] sm:$0xf]
      %v1127 = vld [vmem:[%s1 + $0xc] sm:$0xf]
      %v1128 = vld [vmem:[%s1 + $0x10] sm:$0xf]
      %v1129 = vld [vmem:[%s1 + $0x14] sm:$0xf]
      %v1130 = vld [vmem:[%s1 + $0x18] sm:$0xf]
      %v1131 = vld [vmem:[%s1 + $0x1c] sm:$0xf]
      %v1132 = vld [vmem:[%s1 + $0x20] sm:$0xf]
      %v1133 = vld [vmem:[%s1 + $0x24] sm:$0xf]
      %v1134 = vld [vmem:[%s1 + $0x28] sm:$0xf]
      %v1135 = vld [vmem:[%s1 + $0x2c] sm:$0xf]
      %v1136 = vld [vmem:[%s1 + $0x30] sm:$0xf]
      %v1137 = vld [vmem:[%s1 + $0x34] sm:$0xf]
      %v1138 = vld [vmem:[%s1 + $0x38] sm:$0xf]
      %v1139 = vld [vmem:[%s1 + $0x3c] sm:$0xf]
      %v1140 = vld [vmem:[%s1 + $0x40] sm:$0xf]
      %v1141 = vld [vmem:[%s1 + $0x44] sm:$0xf]
      %v1160 = vunpack.c.l.b16 %v1124
      %v1161 = vunpack.c.l.b16 %v1125
      %v1162 = vunpack.c.l.b16 %v1126
      %v1163 = vunpack.c.l.b16 %v1127
      %v1164 = vunpack.c.l.b16 %v1128
      %v1165 = vunpack.c.l.b16 %v1129
      %v1166 = vunpack.c.l.b16 %v1130
      %v1167 = vunpack.c.l.b16 %v1131
      %v1168 = vunpack.c.l.b16 %v1132
      %v1169 = vunpack.c.l.b16 %v1133
      %v1170 = vunpack.c.l.b16 %v1134
      %v1171 = vunpack.c.l.b16 %v1135
      %v1172 = vunpack.c.l.b16 %v1136
      %v1173 = vunpack.c.l.b16 %v1137
      %v1174 = vunpack.c.l.b16 %v1138
      %v1175 = vunpack.c.l.b16 %v1139
      %v1176 = vunpack.c.l.b16 %v1140
      %v1177 = vunpack.c.l.b16 %v1141
      %v1178 = vpack.c.b16 %v1161, %v1160
      %v1179 = vpack.c.b16 %v1163, %v1162
      %v1180 = vpack.c.b16 %v1165, %v1164
      %v1181 = vpack.c.b16 %v1167, %v1166
      %v1182 = vpack.c.b16 %v1169, %v1168
      %v1183 = vpack.c.b16 %v1171, %v1170
      %v1184 = vpack.c.b16 %v1173, %v1172
      %v1185 = vpack.c.b16 %v1175, %v1174
      %v1186 = vpack.c.b16 %v1177, %v1176
      %v1197 = vsel %vm877, %v599, 0
      %v1200 = vsel %vm877, %v602, 0
      %v1203 = vsel %vm877, %v605, 0
      %v1206 = vsel %vm877, %v608, 0
      %v1209 = vsel %vm877, %v611, 0
      %v1212 = vsel %vm877, %v614, 0
      %v1215 = vsel %vm877, %v617, 0
      %v1218 = vsel %vm877, %v620, 0
      %v1221 = vsel %vm877, %v623, 0
      %v1224 = vsel %vm877, %v626, 0
      %v1227 = vsel %vm877, %v629, 0
      %v1230 = vsel %vm877, %v632, 0
      %v1233 = vsel %vm877, %v635, 0
      %v1236 = vsel %vm877, %v638, 0
      %v1239 = vsel %vm877, %v757, 0
      %v1242 = vsel %vm877, %v876, 0
      %1244 = vmatprep.subr.bf16.mxu0 0
      %1245 = vmatpush1.bf16.msra.mxu0 %v1178
      %1246 = vmatprep.subr.bf16.mxu0 0
      %1247 = vmatpush1.bf16.msra.mxu0 %v1179
      %1248 = vmatprep.subr.bf16.mxu0 0
      %1249 = vmatpush1.bf16.msra.mxu0 %v1180
      %1250 = vmatprep.subr.bf16.mxu0 0
      %1251 = vmatpush1.bf16.msra.mxu0 %v1181
      %1252 = vmatprep.subr.bf16.mxu0 0
      %1253 = vmatpush1.bf16.msra.mxu0 %v1182
      %1254 = vmatprep.subr.bf16.mxu0 0
      %1255 = vmatpush1.bf16.msra.mxu0 %v1183
      %1256 = vmatprep.subr.bf16.mxu0 0
      %1257 = vmatpush1.bf16.msra.mxu0 %v1184
      %1258 = vmatprep.subr.bf16.mxu0 0
      %1259 = vmatpush1.bf16.msra.mxu0 %v1185
      %1260 = vmatprep.subr.bf16.mxu0 0
      %1261 = vmatpush1.bf16.msra.mxu0 %v1186
      %1262 = vmatprep.subr.bf16.mxu0 0
      %1263 = vmatpush1.bf16.msra.mxu0 0
      %1264 = vmatprep.subr.bf16.mxu0 0
      %1265 = vmatpush1.bf16.msra.mxu0 0
      %1266 = vmatprep.subr.bf16.mxu0 0
      %1267 = vmatpush1.bf16.msra.mxu0 0
      %1268 = vmatprep.subr.bf16.mxu0 0
      %1269 = vmatpush1.bf16.msra.mxu0 0
      %1270 = vmatprep.subr.bf16.mxu0 0
      %1271 = vmatpush1.bf16.msra.mxu0 0
      %1272 = vmatprep.subr.bf16.mxu0 0
      %1273 = vmatpush1.bf16.msra.mxu0 0
      %1274 = vmatprep.subr.bf16.mxu0 0
      %1275 = vmatpush1.bf16.msra.mxu0 0
      %1276 = vmatprep.mubr.bf16.mxu0 %v1197
      %1277 = vmatmul.mubr.bf16.gmra.mrb[0].mxu0 %v1077
      %v1278 = vpop.f32.mrb[0].mxu0
      %v1279 = vadd.f32 0.0, %v1278
      %v1280 = vpop.f32.mrb[0].mxu0
      %v1281 = vpop.f32.mrb[0].mxu0
      %v1282 = vadd.f32 0.0, %v1281
      %v1283 = vpop.f32.mrb[0].mxu0
      %1284 = vmatprep.mubr.bf16.mxu0 %v1200
      %1285 = vmatmul.mubr.bf16.gmra.mrb[0].mxu0 %v1080
      %v1286 = vpop.f32.mrb[0].mxu0
      %v1287 = vadd.f32 0.0, %v1286
      %v1288 = vpop.f32.mrb[0].mxu0
      %v1289 = vpop.f32.mrb[0].mxu0
      %v1290 = vadd.f32 0.0, %v1289
      %v1291 = vpop.f32.mrb[0].mxu0
      %1292 = vmatprep.mubr.bf16.mxu0 %v1203
      %1293 = vmatmul.mubr.bf16.gmra.mrb[0].mxu0 %v1083
      %v1294 = vpop.f32.mrb[0].mxu0
      %v1295 = vadd.f32 0.0, %v1294
      %v1296 = vpop.f32.mrb[0].mxu0
      %v1297 = vpop.f32.mrb[0].mxu0
      %v1298 = vadd.f32 0.0, %v1297
      %v1299 = vpop.f32.mrb[0].mxu0
      %1300 = vmatprep.mubr.bf16.mxu0 %v1206
      %1301 = vmatmul.mubr.bf16.gmra.mrb[0].mxu0 %v1086
      %v1302 = vpop.f32.mrb[0].mxu0
      %v1303 = vadd.f32 0.0, %v1302
      %v1304 = vpop.f32.mrb[0].mxu0
      %v1305 = vpop.f32.mrb[0].mxu0
      %v1306 = vadd.f32 0.0, %v1305
      %v1307 = vpop.f32.mrb[0].mxu0
      %1308 = vmatprep.mubr.bf16.mxu0 %v1209
      %1309 = vmatmul.mubr.bf16.gmra.mrb[0].mxu0 %v1089
      %v1310 = vpop.f32.mrb[0].mxu0
      %v1311 = vadd.f32 0.0, %v1310
      %v1312 = vpop.f32.mrb[0].mxu0
      %v1313 = vpop.f32.mrb[0].mxu0
      %v1314 = vadd.f32 0.0, %v1313
      %v1315 = vpop.f32.mrb[0].mxu0
      %1316 = vmatprep.mubr.bf16.mxu0 %v1212
      %1317 = vmatmul.mubr.bf16.gmra.mrb[0].mxu0 %v1092
      %v1318 = vpop.f32.mrb[0].mxu0
      %v1319 = vadd.f32 0.0, %v1318
      %v1320 = vpop.f32.mrb[0].mxu0
      %v1321 = vpop.f32.mrb[0].mxu0
      %v1322 = vadd.f32 0.0, %v1321
      %v1323 = vpop.f32.mrb[0].mxu0
      %1324 = vmatprep.mubr.bf16.mxu0 %v1215
      %1325 = vmatmul.mubr.bf16.gmra.mrb[0].mxu0 %v1095
      %v1326 = vpop.f32.mrb[0].mxu0
      %v1327 = vadd.f32 0.0, %v1326
      %v1328 = vpop.f32.mrb[0].mxu0
      %v1329 = vpop.f32.mrb[0].mxu0
      %v1330 = vadd.f32 0.0, %v1329
      %v1331 = vpop.f32.mrb[0].mxu0
      %1332 = vmatprep.mubr.bf16.mxu0 %v1218
      %1333 = vmatmul.mubr.bf16.gmra.mrb[0].mxu0 %v1098
      %v1334 = vpop.f32.mrb[0].mxu0
      %v1335 = vadd.f32 0.0, %v1334
      %v1336 = vpop.f32.mrb[0].mxu0
      %v1337 = vpop.f32.mrb[0].mxu0
      %v1338 = vadd.f32 0.0, %v1337
      %v1339 = vpop.f32.mrb[0].mxu0
      %1340 = vmatprep.mubr.bf16.mxu0 %v1221
      %1341 = vmatmul.mubr.bf16.gmra.mrb[0].mxu0 %v1101
      %v1342 = vpop.f32.mrb[0].mxu0
      %v1343 = vadd.f32 0.0, %v1342
      %v1344 = vpop.f32.mrb[0].mxu0
      %v1345 = vpop.f32.mrb[0].mxu0
      %v1346 = vadd.f32 0.0, %v1345
      %v1347 = vpop.f32.mrb[0].mxu0
      %1348 = vmatprep.mubr.bf16.mxu0 %v1224
      %1349 = vmatmul.mubr.bf16.gmra.mrb[0].mxu0 %v1104
      %v1350 = vpop.f32.mrb[0].mxu0
      %v1351 = vadd.f32 0.0, %v1350
      %v1352 = vpop.f32.mrb[0].mxu0
      %v1353 = vpop.f32.mrb[0].mxu0
      %v1354 = vadd.f32 0.0, %v1353
      %v1355 = vpop.f32.mrb[0].mxu0
      %1356 = vmatprep.mubr.bf16.mxu0 %v1227
      %1357 = vmatmul.mubr.bf16.gmra.mrb[0].mxu0 %v1107
      %v1358 = vpop.f32.mrb[0].mxu0
      %v1359 = vadd.f32 0.0, %v1358
      %v1360 = vpop.f32.mrb[0].mxu0
      %v1361 = vpop.f32.mrb[0].mxu0
      %v1362 = vadd.f32 0.0, %v1361
      %v1363 = vpop.f32.mrb[0].mxu0
      %1364 = vmatprep.mubr.bf16.mxu0 %v1230
      %1365 = vmatmul.mubr.bf16.gmra.mrb[0].mxu0 %v1110
      %v1366 = vpop.f32.mrb[0].mxu0
      %v1367 = vadd.f32 0.0, %v1366
      %v1368 = vpop.f32.mrb[0].mxu0
      %v1369 = vpop.f32.mrb[0].mxu0
      %v1370 = vadd.f32 0.0, %v1369
      %v1371 = vpop.f32.mrb[0].mxu0
      %1372 = vmatprep.mubr.bf16.mxu0 %v1233
      %1373 = vmatmul.mubr.bf16.gmra.mrb[0].mxu0 %v1113
      %v1374 = vpop.f32.mrb[0].mxu0
      %v1375 = vadd.f32 0.0, %v1374
      %v1376 = vpop.f32.mrb[0].mxu0
      %v1377 = vpop.f32.mrb[0].mxu0
      %v1378 = vadd.f32 0.0, %v1377
      %v1379 = vpop.f32.mrb[0].mxu0
      %1380 = vmatprep.mubr.bf16.mxu0 %v1236
      %1381 = vmatmul.mubr.bf16.gmra.mrb[0].mxu0 %v1116
      %v1382 = vpop.f32.mrb[0].mxu0
      %v1383 = vadd.f32 0.0, %v1382
      %v1384 = vpop.f32.mrb[0].mxu0
      %v1385 = vpop.f32.mrb[0].mxu0
      %v1386 = vadd.f32 0.0, %v1385
      %v1387 = vpop.f32.mrb[0].mxu0
      %1388 = vmatprep.mubr.bf16.mxu0 %v1239
      %1389 = vmatmul.mubr.bf16.gmra.mrb[0].mxu0 %v1119
      %v1390 = vpop.f32.mrb[0].mxu0
      %v1391 = vadd.f32 0.0, %v1390
      %v1392 = vpop.f32.mrb[0].mxu0
      %v1393 = vpop.f32.mrb[0].mxu0
      %v1394 = vadd.f32 0.0, %v1393
      %v1395 = vpop.f32.mrb[0].mxu0
      %1396 = vmatprep.mubr.bf16.mxu0 %v1242
      %1397 = vmatmul.mubr.bf16.gmra.mrb[0].mxu0 %v1122
      %v1398 = vpop.f32.mrb[0].mxu0
      %v1399 = vadd.f32 0.0, %v1398
      %v1400 = vpop.f32.mrb[0].mxu0
      %v1401 = vpop.f32.mrb[0].mxu0
      %v1402 = vadd.f32 0.0, %v1401
      %v1403 = vpop.f32.mrb[0].mxu0
      %1404 = vdwg.mxu0
      %1405 = vst [vmem:[%s177] sm:$0xff] %v1279
      %1406 = vst [vmem:[%s177 + $0x8] sm:$0xff] %v1282
      %1407 = vst [vmem:[%s177 + $0x10] sm:$0xff] %v1287
      %1408 = vst [vmem:[%s177 + $0x18] sm:$0xff] %v1290
      %1409 = vst [vmem:[%s177 + $0x20] sm:$0xff] %v1295
      %1410 = vst [vmem:[%s177 + $0x28] sm:$0xff] %v1298
      %1411 = vst [vmem:[%s177 + $0x30] sm:$0xff] %v1303
      %1412 = vst [vmem:[%s177 + $0x38] sm:$0xff] %v1306
      %1413 = vst [vmem:[%s177 + $0x40] sm:$0xff] %v1311
      %1414 = vst [vmem:[%s177 + $0x48] sm:$0xff] %v1314
      %1415 = vst [vmem:[%s177 + $0x50] sm:$0xff] %v1319
      %1416 = vst [vmem:[%s177 + $0x58] sm:$0xff] %v1322
      %1417 = vst [vmem:[%s177 + $0x60] sm:$0xff] %v1327
      %1418 = vst [vmem:[%s177 + $0x68] sm:$0xff] %v1330
      %1419 = vst [vmem:[%s177 + $0x70] sm:$0xff] %v1335
      %1420 = vst [vmem:[%s177 + $0x78] sm:$0xff] %v1338
      %1421 = vst [vmem:[%s177 + $0x80] sm:$0xff] %v1343
      %1422 = vst [vmem:[%s177 + $0x88] sm:$0xff] %v1346
      %1423 = vst [vmem:[%s177 + $0x90] sm:$0xff] %v1351
      %1424 = vst [vmem:[%s177 + $0x98] sm:$0xff] %v1354
      %1425 = vst [vmem:[%s177 + $0xa0] sm:$0xff] %v1359
      %1426 = vst [vmem:[%s177 + $0xa8] sm:$0xff] %v1362
      %1427 = vst [vmem:[%s177 + $0xb0] sm:$0xff] %v1367
      %1428 = vst [vmem:[%s177 + $0xb8] sm:$0xff] %v1370
      %1429 = vst [vmem:[%s177 + $0xc0] sm:$0xff] %v1375
      %1430 = vst [vmem:[%s177 + $0xc8] sm:$0xff] %v1378
      %1431 = vst [vmem:[%s177 + $0xd0] sm:$0xff] %v1383
      %1432 = vst [vmem:[%s177 + $0xd8] sm:$0xff] %v1386
      %1433 = vst [vmem:[%s177 + $0xe0] sm:$0xff] %v1391
      %1434 = vst [vmem:[%s177 + $0xe8] sm:$0xff] %v1394
      %1435 = vst [vmem:[%s177 + $0xf0] sm:$0xff] %v1399
      %1436 = vst [vmem:[%s177 + $0xf8] sm:$0xff] %v1402
      %v1437 = vadd.f32 %v1279, %v1282
      %v1438 = vadd.f32 %v1437, %v1287
      %v1439 = vadd.f32 %v1438, %v1290
      %v1440 = vadd.f32 %v1439, %v1295
      %v1441 = vadd.f32 %v1440, %v1298
      %v1442 = vadd.f32 %v1441, %v1303
      %v1443 = vadd.f32 %v1442, %v1306
      %v1444 = vadd.f32 %v1443, %v1311
      %v1445 = vadd.f32 %v1444, %v1314
      %v1446 = vadd.f32 %v1445, %v1319
      %v1447 = vadd.f32 %v1446, %v1322
      %v1448 = vadd.f32 %v1447, %v1327
      %v1449 = vadd.f32 %v1448, %v1330
      %v1450 = vadd.f32 %v1449, %v1335
      %v1451 = vadd.f32 %v1450, %v1338
      %v1452 = vadd.f32 %v1451, %v1343
      %v1453 = vadd.f32 %v1452, %v1346
      %v1454 = vadd.f32 %v1453, %v1351
      %v1455 = vadd.f32 %v1454, %v1354
      %v1456 = vadd.f32 %v1455, %v1359
      %v1457 = vadd.f32 %v1456, %v1362
      %v1458 = vadd.f32 %v1457, %v1367
      %v1459 = vadd.f32 %v1458, %v1370
      %v1460 = vadd.f32 %v1459, %v1375
      %v1461 = vadd.f32 %v1460, %v1378
      %v1462 = vadd.f32 %v1461, %v1383
      %v1463 = vadd.f32 %v1462, %v1386
      %v1464 = vadd.f32 %v1463, %v1391
      %v1465 = vadd.f32 %v1464, %v1394
      %v1466 = vadd.f32 %v1465, %v1399
      %v1467 = vadd.f32 %v1466, %v1402
      %v1468 = vrot.slane %v1467, 4
      %v1469 = vadd.f32 %v1467, %v1468
      %v1470 = vrot.slane %v1469, 2
      %v1471 = vadd.f32 %v1469, %v1470
      %v1472 = vrot.slane %v1471, 1
      %v1473 = vadd.f32 %v1471, %v1472
      %1474 = vst [vmem:[%s181] sm:$0x1] %v1473
      %v1475 = vmul.f32 %v1279, %v1279
      %v1476 = vmul.f32 %v1282, %v1282
      %v1477 = vmul.f32 %v1287, %v1287
      %v1478 = vmul.f32 %v1290, %v1290
      %v1479 = vmul.f32 %v1295, %v1295
      %v1480 = vmul.f32 %v1298, %v1298
      %v1481 = vmul.f32 %v1303, %v1303
      %v1482 = vmul.f32 %v1306, %v1306
      %v1483 = vmul.f32 %v1311, %v1311
      %v1484 = vmul.f32 %v1314, %v1314
      %v1485 = vmul.f32 %v1319, %v1319
      %v1486 = vmul.f32 %v1322, %v1322
      %v1487 = vmul.f32 %v1327, %v1327
      %v1488 = vmul.f32 %v1330, %v1330
      %v1489 = vmul.f32 %v1335, %v1335
      %v1490 = vmul.f32 %v1338, %v1338
      %v1491 = vmul.f32 %v1343, %v1343
      %v1492 = vmul.f32 %v1346, %v1346
      %v1493 = vmul.f32 %v1351, %v1351
      %v1494 = vmul.f32 %v1354, %v1354
      %v1495 = vmul.f32 %v1359, %v1359
      %v1496 = vmul.f32 %v1362, %v1362
      %v1497 = vmul.f32 %v1367, %v1367
      %v1498 = vmul.f32 %v1370, %v1370
      %v1499 = vmul.f32 %v1375, %v1375
      %v1500 = vmul.f32 %v1378, %v1378
      %v1501 = vmul.f32 %v1383, %v1383
      %v1502 = vmul.f32 %v1386, %v1386
      %v1503 = vmul.f32 %v1391, %v1391
      %v1504 = vmul.f32 %v1394, %v1394
      %v1505 = vmul.f32 %v1399, %v1399
      %v1506 = vmul.f32 %v1402, %v1402
      %v1507 = vadd.f32 %v1475, %v1476
      %v1508 = vadd.f32 %v1507, %v1477
      %v1509 = vadd.f32 %v1508, %v1478
      %v1510 = vadd.f32 %v1509, %v1479
      %v1511 = vadd.f32 %v1510, %v1480
      %v1512 = vadd.f32 %v1511, %v1481
      %v1513 = vadd.f32 %v1512, %v1482
      %v1514 = vadd.f32 %v1513, %v1483
      %v1515 = vadd.f32 %v1514, %v1484
      %v1516 = vadd.f32 %v1515, %v1485
      %v1517 = vadd.f32 %v1516, %v1486
      %v1518 = vadd.f32 %v1517, %v1487
      %v1519 = vadd.f32 %v1518, %v1488
      %v1520 = vadd.f32 %v1519, %v1489
      %v1521 = vadd.f32 %v1520, %v1490
      %v1522 = vadd.f32 %v1521, %v1491
      %v1523 = vadd.f32 %v1522, %v1492
      %v1524 = vadd.f32 %v1523, %v1493
      %v1525 = vadd.f32 %v1524, %v1494
      %v1526 = vadd.f32 %v1525, %v1495
      %v1527 = vadd.f32 %v1526, %v1496
      %v1528 = vadd.f32 %v1527, %v1497
      %v1529 = vadd.f32 %v1528, %v1498
      %v1530 = vadd.f32 %v1529, %v1499
      %v1531 = vadd.f32 %v1530, %v1500
      %v1532 = vadd.f32 %v1531, %v1501
      %v1533 = vadd.f32 %v1532, %v1502
      %v1534 = vadd.f32 %v1533, %v1503
      %v1535 = vadd.f32 %v1534, %v1504
      %v1536 = vadd.f32 %v1535, %v1505
      %v1537 = vadd.f32 %v1536, %v1506
      %v1538 = vrot.slane %v1537, 4
      %v1539 = vadd.f32 %v1537, %v1538
      %v1540 = vrot.slane %v1539, 2
      %v1541 = vadd.f32 %v1539, %v1540
      %v1542 = vrot.slane %v1541, 1
      %v1543 = vadd.f32 %v1541, %v1542
      %1544 = vst [vmem:[%s181 + $0x1] sm:$0x1] %v1543
      %p1545 = scmp.lt.s32.totalorder %s15, 1
      %s1546 = scalar_select %p1545, %s15, 1
      %s1547 = smul.addr %s1546, 32
      %s1548 = smul.addr %s1547, 8
      %s1549 = scalar_lea.vmem %s2, %s1548
      %p1550 = scmp.lt.s32.totalorder %s15, 1
      %s1551 = scalar_select %p1550, %s15, 1
      %s1552 = smul.addr %s1551, 2
      %s1553 = scalar_lea.vmem %s3, %s1552
      // Predicated region
      $region29: #{conv_up_bn_relu_forward.2} parent=27 // pred_check
        %p1554 = pneg %p80
      $region30: #{conv_up_bn_relu_forward.2} parent=27 // pred_check_branch
        %1556 = sbr.rel (%p1554) target = $region32
      $region31: #{conv_up_bn_relu_forward.2} parent=27 // pred_region
        _
      $region32: #{conv_up_bn_relu_forward.2} parent=27 // pred_fallthru
        _
      // Predicated region
      $region33: #{conv_up_bn_relu_forward.2} parent=27 // pred_check
        %p1557 = pneg %p106
      $region34: #{conv_up_bn_relu_forward.2} parent=27 // pred_check_branch
        %1559 = sbr.rel (%p1557) target = $region36
      $region35: #{conv_up_bn_relu_forward.2} parent=27 // pred_region
        _
      $region36: #{conv_up_bn_relu_forward.2} parent=27 // pred_fallthru
        _
    $region28: #{conv_up_bn_relu_forward.2} parent=5 // pred_fallthru
      _
    %p1560 = scmp.le.s32.totalorder 2, %s10
    // Predicated region
    $region37: #{conv_up_bn_relu_forward.2} parent=5 // pred_check
      %p1561 = pneg %p1560
    $region38: #{conv_up_bn_relu_forward.2} parent=5 // pred_check_branch
      %1563 = sbr.rel (%p1561) target = $region40
    $region39: #{conv_up_bn_relu_forward.2} parent=5 // pred_region
      %s1564 = ssub.s32 %s10, 2
      // Predicated region
      $region41: #{conv_up_bn_relu_forward.2} parent=39 // pred_check
        %p1565 = pneg %p86
      $region42: #{conv_up_bn_relu_forward.2} parent=39 // pred_check_branch
        %1567 = sbr.rel (%p1565) target = $region44
      $region43: #{conv_up_bn_relu_forward.2} parent=39 // pred_region
        %p1568 = scmp.lt.s32.totalorder %s16, 1
        %s1569 = scalar_select %p1568, %s16, 1
        %s1570 = smul.addr %s1569, 32
        %s1571 = smul.addr %s1570, 8
        %s1572 = scalar_lea.vmem %s2, %s1571
      $region44: #{conv_up_bn_relu_forward.2} parent=39 // pred_fallthru
        _
      // Predicated region
      $region45: #{conv_up_bn_relu_forward.2} parent=39 // pred_check
        %p1573 = pneg %p112
      $region46: #{conv_up_bn_relu_forward.2} parent=39 // pred_check_branch
        %1575 = sbr.rel (%p1573) target = $region48
      $region47: #{conv_up_bn_relu_forward.2} parent=39 // pred_region
        %p1576 = scmp.lt.s32.totalorder %s16, 1
        %s1577 = scalar_select %p1576, %s16, 1
        %s1578 = smul.addr %s1577, 2
        %s1579 = scalar_lea.vmem %s3, %s1578
      $region48: #{conv_up_bn_relu_forward.2} parent=39 // pred_fallthru
        _
    $region40: #{conv_up_bn_relu_forward.2} parent=5 // pred_fallthru
      _
  $region6: #{conv_up_bn_relu_forward.2} parent=0 // loop_footer
    %s14 = sadd.s32 1, %s10
  $region7: #{conv_up_bn_relu_forward.2} parent=0 // loop_footer_branch
    %9 = sbr.rel target = $region3
  $region8: #{conv_up_bn_relu_forward.2} parent=0 // loop_exit
    _

</llo_original>
